<compile_context>
chip_gen: v7x
topology: tpu7x:2x2x1
jax: 0.10.0
libtpu: 0.0.40
codegen_flags: <defaults>
</compile_context>

<pallas_src>
import functools
import math

import jax
import jax.numpy as jnp
from jax.experimental import pallas as pl
from jax.experimental.pallas import tpu as pltpu

HIDDEN1 = 1024
HIDDEN2 = 512


def _round_up(x, m):
    return (x + m - 1) // m * m


# --------------------------------------------------------------------------------------
# Kernels: all operands resident in VMEM, chained MXU matmuls with f32 accumulation.
# Activations/weights are cast to bf16 at the MXU input; bias adds stay on the f32 VPU path.
# --------------------------------------------------------------------------------------
def _qnet3_kernel(x_ref, w1_ref, b1_ref, w2_ref, b2_ref, w3_ref, b3_ref, out_ref):
    x = x_ref[...].astype(jnp.bfloat16)
    h1 = (
        jnp.dot(x, w1_ref[...].astype(jnp.bfloat16), preferred_element_type=jnp.float32)
        + b1_ref[...]
    )
    h2 = (
        jnp.dot(
            h1.astype(jnp.bfloat16),
            w2_ref[...].astype(jnp.bfloat16),
            preferred_element_type=jnp.float32,
        )
        + b2_ref[...]
    )
    o = (
        jnp.dot(
            h2.astype(jnp.bfloat16),
            w3_ref[...].astype(jnp.bfloat16),
            preferred_element_type=jnp.float32,
        )
        + b3_ref[...]
    )
    out_ref[...] = o.astype(out_ref.dtype)


def _qnet1_kernel(x_ref, w_ref, b_ref, out_ref):
    # Folded (single-linear) variant of the activation-free MLP.
    x = x_ref[...].astype(jnp.bfloat16)
    o = (
        jnp.dot(x, w_ref[...].astype(jnp.bfloat16), preferred_element_type=jnp.float32)
        + b_ref[...]
    )
    out_ref[...] = o.astype(out_ref.dtype)


def _vmem_limit_bytes(bb, F, ws, A_pad):
    """Conservative VMEM footprint estimate with headroom, capped per-chip."""
    w_bytes = sum(2 * 2 * w.shape[0] * w.shape[1] for w in ws)     # bf16 weights, 2 buffers
    b_bytes = sum(2 * 4 * w.shape[1] for w in ws)                  # f32 biases, 2 buffers
    io_bytes = 2 * 4 * bb * (F + A_pad)                            # f32 x / out tiles, 2 buffers
    act_bytes = (4 + 2) * bb * sum(w.shape[1] for w in ws)         # f32 + bf16 intermediates
    est = w_bytes + b_bytes + io_bytes + act_bytes
    cap = 48 << 20  # v7x-safe fallback (64 MiB per TensorCore)
    try:
        # 3/4 of the physical per-core VMEM: 48 MiB on v7x, 96 MiB on v5e/v6e.
        cap = min(int(pltpu.get_tpu_info().vmem_capacity_bytes) * 3 // 4, 96 << 20)
    except Exception:
        pass
    return int(min(max(2 * est, 16 << 20), cap))


@functools.partial(jax.jit, static_argnames=("block_b",))
def qnet_forward_padded(x, params, block_b=512):
    """Forward pass returning the lane-dense padded output [B, A_pad] (A_pad = round_up(A,128)).

    Columns >= actions are zero. Use this when the consumer can slice (lets XLA fuse the slice
    and avoids an extra HBM pass over the padded f32 buffer).
    `params` is either 6 arrays (w1,b1,w2,b2,w3,b3: per-layer) or 2 arrays (folded single layer),
    with weights stored pre-transposed [in, out] and biases of shape (1, out).
    """
    B, F = x.shape
    ws = list(params[0::2])
    bs = list(params[1::2])
    n_layers = len(ws)
    assert n_layers in (1, 3), "expected per-layer (3) or folded (1) Q_Net params"

    A = ws[-1].shape[1]
    A_pad = _round_up(max(A, 128), 128)
    if A_pad != A:
        ws[-1] = jnp.pad(ws[-1], ((0, 0), (0, A_pad - A)))
        bs[-1] = jnp.pad(bs[-1], ((0, 0), (0, A_pad - A)))

    # Batch tile: large, always a multiple of 8, capped at B.
    bb = max(8, _round_up(min(block_b, B), 8))
    # Megacore: whenever there are >= 2 sublane-rows of work, keep >= 2 grid steps so the
    # "parallel" batch axis can be sharded across both v7x TensorCores.  Cost on single-TC
    # chips is one extra ~0.35us grid step (constant weight blocks are not re-DMA'd).
    if B >= 16 and pl.cdiv(B, bb) == 1:
        bb = max(8, _round_up(pl.cdiv(B, 2), 8))
    grid = (pl.cdiv(B, bb),)

    in_specs = [pl.BlockSpec((bb, F), lambda i: (i, 0))]  # x tile (varies over grid)
    operands = [x]
    for w, b in zip(ws, bs):
        in_specs.append(pl.BlockSpec(w.shape, lambda i: (0, 0)))  # weight (constant block)
        in_specs.append(pl.BlockSpec(b.shape, lambda i: (0, 0)))  # bias (constant block)
        operands.extend([w, b])

    kernel = _qnet3_kernel if n_layers == 3 else _qnet1_kernel

    out = pl.pallas_call(
        kernel,
        out_shape=jax.ShapeDtypeStruct((B, A_pad), jnp.float32),
        grid_spec=pltpu.PrefetchScalarGridSpec(
            num_scalar_prefetch=0,
            grid=grid,
            in_specs=in_specs,
            out_specs=pl.BlockSpec((bb, A_pad), lambda i: (i, 0)),
        ),
        compiler_params=pltpu.CompilerParams(
            dimension_semantics=("parallel",),
            vmem_limit_bytes=_vmem_limit_bytes(bb, F, ws, A_pad),
        ),
    )(*operands)
    return out


@functools.partial(jax.jit, static_argnames=("block_b",))
def qnet_forward(x, params, block_b=512):
    """Q_Net forward: x [B, in_features] -> q_values [B, actions] (drop-in vs. the torch module)."""
    A = params[-2].shape[1]
    out = qnet_forward_padded(x, params, block_b=block_b)
    return out[:, :A]


# --------------------------------------------------------------------------------------
# Parameter init / preparation.
# --------------------------------------------------------------------------------------
def init_qnet_params(key, in_features, actions):
    """f32 params mimicking torch.nn.Linear defaults (uniform +/- 1/sqrt(fan_in)).

    Weights are stored pre-transposed ([in, out]); biases have shape (1, out).
    """
    dims = [(in_features, HIDDEN1), (HIDDEN1, HIDDEN2), (HIDDEN2, actions)]
    params = []
    for fan_in, fan_out in dims:
        key, kw, kb = jax.random.split(key, 3)
        bound = 1.0 / math.sqrt(fan_in)
        w_t = jax.random.uniform(kw, (fan_in, fan_out), jnp.float32, -bound, bound)
        b = jax.random.uniform(kb, (1, fan_out), jnp.float32, -bound, bound)
        params.extend([w_t, b])
    return tuple(params)


def prepare_qnet_params(params_f32, fold=False):
    """Convert f32 params into the kernel's format (bf16 weights, f32 biases).

    The bf16 weight quantization is an explicit choice (halves weight DMA, enables bf16 MXU);
    validate Q-value / argmax stability against the trained f32 model before deploying.
    fold=True exploits the fact that this MLP has NO activations: the three Linear layers are
    collapsed offline, in f32 (mathematically exact), into a single [in_features, actions]
    layer, removing ~98% of the FLOPs and nearly all of the weight-DMA prologue.
    """
    ws = [jnp.asarray(w, jnp.float32) for w in params_f32[0::2]]
    bs = [jnp.asarray(b, jnp.float32) for b in params_f32[1::2]]
    if fold:
        w, b = ws[0], bs[0]
        for wi, bi in zip(ws[1:], bs[1:]):
            w = w @ wi
            b = b @ wi + bi
        ws, bs = [w], [b]
    out = []
    for w, b in zip(ws, bs):
        out.extend([w.astype(jnp.bfloat16), b.astype(jnp.float32)])
    return tuple(out)


# --------------------------------------------------------------------------------------
# References.
# --------------------------------------------------------------------------------------
def qnet_reference_f32(x, params_f32):
    """Pure f32 reference of the PyTorch forward (three Linears, no activations)."""
    h = x
    for w, b in zip(params_f32[0::2], params_f32[1::2]):
        h = h @ w + b
    return h


def qnet_reference_mixed(x, params):
    """Reference matching the kernel's mixed precision (bf16 MXU inputs, f32 accumulate/bias)."""
    h = x
    for w, b in zip(params[0::2], params[1::2]):
        h = (
            jnp.dot(h.astype(jnp.bfloat16).astype(jnp.float32), w.astype(jnp.float32))
            + b.astype(jnp.float32)
        )
    return h


if __name__ == "__main__":
    key = jax.random.PRNGKey(0)
    in_features = 32
    actions = 8
    batch = 40  # small demo batch; exercises the megacore split + partial last block

    k_params, k_x = jax.random.split(key)
    params_f32 = init_qnet_params(k_params, in_features, actions)
    x = jax.random.normal(k_x, (batch, in_features), jnp.float32)

    params = prepare_qnet_params(params_f32)                 # per-layer (matches torch structure)
    params_folded = prepare_qnet_params(params_f32, fold=True)  # single fused linear

    # Default tile (megacore-split into 2 grid steps for batch=40).
    q_vals = jax.block_until_ready(qnet_forward(x, params))
    # Small tile -> multi-step grid with a partial last block (tiling/masking path).
    q_tiled = jax.block_until_ready(qnet_forward(x, params, block_b=16))
    # Folded single-layer path.
    q_folded = jax.block_until_ready(qnet_forward(x, params_folded))

    ref_f32 = qnet_reference_f32(x, params_f32)
    ref_mix = qnet_reference_mixed(x, params)

    assert q_vals.shape == (batch, actions)
    assert q_tiled.shape == (batch, actions)
    assert q_folded.shape == (batch, actions)
    # Kernel vs matching mixed-precision reference: only f32 accumulation order differs.
    assert jnp.allclose(q_vals, ref_mix, atol=1e-2, rtol=1e-2), "mismatch (default tile)"
    assert jnp.allclose(q_tiled, ref_mix, atol=1e-2, rtol=1e-2), "mismatch (small tile)"
    # Both kernel paths vs full-f32 torch semantics (bf16 weight quantization -> loose tol).
    assert jnp.allclose(q_vals, ref_f32, atol=5e-2, rtol=5e-2), "mismatch vs f32 reference"
    assert jnp.allclose(q_folded, ref_f32, atol=5e-2, rtol=5e-2), "mismatch (folded path)"

    print("KERNEL_OK")
</pallas_src>

<mosaic_0001>
module attributes {stable_mosaic.version = 11 : i64} {
  func.func @_qnet3_kernel(%arg0: i32, %arg1: memref<24x32xf32, #tpu.memory_space<vmem>>, %arg2: memref<32x1024xbf16, #tpu.memory_space<vmem>>, %arg3: memref<1x1024xf32, #tpu.memory_space<vmem>>, %arg4: memref<1024x512xbf16, #tpu.memory_space<vmem>>, %arg5: memref<1x512xf32, #tpu.memory_space<vmem>>, %arg6: memref<512x128xbf16, #tpu.memory_space<vmem>>, %arg7: memref<1x128xf32, #tpu.memory_space<vmem>>, %arg8: memref<24x128xf32, #tpu.memory_space<vmem>>) attributes {dimension_semantics = [#tpu.dimension_semantics<parallel>], iteration_bounds = array<i64: 2>, scalar_prefetch = 0 : i64, scratch_operands = 0 : i64, tpu.core_type = #tpu.core_type<tc>, window_params = [{transform_indices = @transform_0, window_bounds = array<i64: 24, 32>}, {pipeline_mode = #tpu.pipeline_mode<synchronous>, transform_indices = @transform_1, window_bounds = array<i64: 32, 1024>}, {pipeline_mode = #tpu.pipeline_mode<synchronous>, transform_indices = @transform_2, window_bounds = array<i64: 1, 1024>}, {pipeline_mode = #tpu.pipeline_mode<synchronous>, transform_indices = @transform_3, window_bounds = array<i64: 1024, 512>}, {pipeline_mode = #tpu.pipeline_mode<synchronous>, transform_indices = @transform_4, window_bounds = array<i64: 1, 512>}, {pipeline_mode = #tpu.pipeline_mode<synchronous>, transform_indices = @transform_5, window_bounds = array<i64: 512, 128>}, {pipeline_mode = #tpu.pipeline_mode<synchronous>, transform_indices = @transform_6, window_bounds = array<i64: 1, 128>}, {transform_indices = @transform_7, window_bounds = array<i64: 24, 128>}]} {
    %c0 = arith.constant 0 : index
    %c0_0 = arith.constant 0 : index
    %0 = vector.load %arg1[%c0, %c0_0] : memref<24x32xf32, #tpu.memory_space<vmem>>, vector<24x32xf32>
    %1 = arith.truncf %0 : vector<24x32xf32> to vector<24x32xbf16>
    %c0_1 = arith.constant 0 : index
    %c0_2 = arith.constant 0 : index
    %2 = vector.load %arg2[%c0_1, %c0_2] : memref<32x1024xbf16, #tpu.memory_space<vmem>>, vector<32x1024xbf16>
    %cst = arith.constant dense<0.000000e+00> : vector<24x1024xf32>
    %3 = tpu.matmul %1, %2, %cst {dimension_numbers = #tpu.dot_dimension_numbers<[1], [0], [0], [1], [0, 0, 1, 1], [], []>} : vector<24x32xbf16>, vector<32x1024xbf16>, vector<24x1024xf32> -> vector<24x1024xf32>
    %c0_3 = arith.constant 0 : index
    %c0_4 = arith.constant 0 : index
    %4 = vector.load %arg3[%c0_3, %c0_4] : memref<1x1024xf32, #tpu.memory_space<vmem>>, vector<1x1024xf32>
    %5 = vector.broadcast %4 : vector<1x1024xf32> to vector<24x1024xf32>
    %6 = arith.addf %3, %5 : vector<24x1024xf32>
    %7 = arith.truncf %6 : vector<24x1024xf32> to vector<24x1024xbf16>
    %c0_5 = arith.constant 0 : index
    %c0_6 = arith.constant 0 : index
    %8 = vector.load %arg4[%c0_5, %c0_6] : memref<1024x512xbf16, #tpu.memory_space<vmem>>, vector<1024x512xbf16>
    %cst_7 = arith.constant dense<0.000000e+00> : vector<24x512xf32>
    %9 = tpu.matmul %7, %8, %cst_7 {dimension_numbers = #tpu.dot_dimension_numbers<[1], [0], [0], [1], [0, 0, 1, 1], [], []>} : vector<24x1024xbf16>, vector<1024x512xbf16>, vector<24x512xf32> -> vector<24x512xf32>
    %c0_8 = arith.constant 0 : index
    %c0_9 = arith.constant 0 : index
    %10 = vector.load %arg5[%c0_8, %c0_9] : memref<1x512xf32, #tpu.memory_space<vmem>>, vector<1x512xf32>
    %11 = vector.broadcast %10 : vector<1x512xf32> to vector<24x512xf32>
    %12 = arith.addf %9, %11 : vector<24x512xf32>
    %13 = arith.truncf %12 : vector<24x512xf32> to vector<24x512xbf16>
    %c0_10 = arith.constant 0 : index
    %c0_11 = arith.constant 0 : index
    %14 = vector.load %arg6[%c0_10, %c0_11] : memref<512x128xbf16, #tpu.memory_space<vmem>>, vector<512x128xbf16>
    %cst_12 = arith.constant dense<0.000000e+00> : vector<24x128xf32>
    %15 = tpu.matmul %13, %14, %cst_12 {dimension_numbers = #tpu.dot_dimension_numbers<[1], [0], [0], [1], [0, 0, 1, 1], [], []>} : vector<24x512xbf16>, vector<512x128xbf16>, vector<24x128xf32> -> vector<24x128xf32>
    %c0_13 = arith.constant 0 : index
    %c0_14 = arith.constant 0 : index
    %16 = vector.load %arg7[%c0_13, %c0_14] : memref<1x128xf32, #tpu.memory_space<vmem>>, vector<1x128xf32>
    %17 = vector.broadcast %16 : vector<1x128xf32> to vector<24x128xf32>
    %18 = arith.addf %15, %17 : vector<24x128xf32>
    %c0_15 = arith.constant 0 : index
    %c0_16 = arith.constant 0 : index
    %19 = vector.load %arg8[%c0_15, %c0_16] : memref<24x128xf32, #tpu.memory_space<vmem>>, vector<24x128xf32>
    tpu.vector_store %arg8[%c0_15, %c0_16], %18 {strides = array<i32>} : memref<24x128xf32, #tpu.memory_space<vmem>>, vector<24x128xf32>,
    return
  }
  func.func @transform_0(%arg0: i32) -> (i32, i32) {
    %c0_i32 = arith.constant 0 : i32
    %c0_i32_0 = arith.constant 0 : i32
    return %arg0, %c0_i32 : i32, i32
  }
  func.func @transform_1(%arg0: i32) -> (i32, i32) {
    %c0_i32 = arith.constant 0 : i32
    %c0_i32_0 = arith.constant 0 : i32
    %c0_i32_1 = arith.constant 0 : i32
    return %c0_i32, %c0_i32_0 : i32, i32
  }
  func.func @transform_2(%arg0: i32) -> (i32, i32) {
    %c0_i32 = arith.constant 0 : i32
    %c0_i32_0 = arith.constant 0 : i32
    %c0_i32_1 = arith.constant 0 : i32
    return %c0_i32, %c0_i32_0 : i32, i32
  }
  func.func @transform_3(%arg0: i32) -> (i32, i32) {
    %c0_i32 = arith.constant 0 : i32
    %c0_i32_0 = arith.constant 0 : i32
    %c0_i32_1 = arith.constant 0 : i32
    return %c0_i32, %c0_i32_0 : i32, i32
  }
  func.func @transform_4(%arg0: i32) -> (i32, i32) {
    %c0_i32 = arith.constant 0 : i32
    %c0_i32_0 = arith.constant 0 : i32
    %c0_i32_1 = arith.constant 0 : i32
    return %c0_i32, %c0_i32_0 : i32, i32
  }
  func.func @transform_5(%arg0: i32) -> (i32, i32) {
    %c0_i32 = arith.constant 0 : i32
    %c0_i32_0 = arith.constant 0 : i32
    %c0_i32_1 = arith.constant 0 : i32
    return %c0_i32, %c0_i32_0 : i32, i32
  }
  func.func @transform_6(%arg0: i32) -> (i32, i32) {
    %c0_i32 = arith.constant 0 : i32
    %c0_i32_0 = arith.constant 0 : i32
    %c0_i32_1 = arith.constant 0 : i32
    return %c0_i32, %c0_i32_0 : i32, i32
  }
  func.func @transform_7(%arg0: i32) -> (i32, i32) {
    %c0_i32 = arith.constant 0 : i32
    %c0_i32_0 = arith.constant 0 : i32
    return %arg0, %c0_i32 : i32, i32
  }
}

</mosaic_0001>

<llo_original>
// kernel: qnet_forward_padded.1
$region0: #{qnet_forward_padded.1}
  #allocation0 [shape = 'u32[]', space=smem, size = 0x4, offset = 0x4, fixed_abs, tag = 'smem constant byte address 0x4 - core index']
  #allocation1 [shape = 'u32[144,128]{1,0:T(1,128)}', space=vmem, size = 0x12000, scoped, tag = 'internal scratch']
  %s0 = inlined_call_operand.vmem [shape: f32[40,32], index: 0, kind: input, shape index: {}]
  %s1 = inlined_call_operand.vmem [shape: bf16[32,1024], index: 1, kind: input, shape index: {}]
  %s2 = inlined_call_operand.vmem [shape: f32[1,1024], index: 2, kind: input, shape index: {}]
  %s3 = inlined_call_operand.hbm [shape: bf16[1024,512], index: 3, kind: input, shape index: {}]
  %s4 = inlined_call_operand.vmem [shape: f32[1,512], index: 4, kind: input, shape index: {}]
  %s5 = inlined_call_operand.vmem [shape: bf16[512,128], index: 5, kind: input, shape index: {}]
  %s6 = inlined_call_operand.vmem [shape: f32[1,128], index: 6, kind: input, shape index: {}]
  %s7 = inlined_call_operand.hbm [shape: f32[40,128], index: 7, kind: output, shape index: {}]
  %s8 = sld [smem:[#allocation0]]
  $region65: #{qnet_forward_padded.1} parent=0
    _
  %s10 = ssub.s32 1, %s8
  %s11 = scalar_select 0, %s10, %s8
  $region1: #{qnet_forward_padded.1} parent=0
    #allocation2 [shape = 'u8[1048576]{0}', space=vmem, size = 0x100000, scoped, tag = 'input window, operand 3, single buffered']
    #allocation3 [shape = 's32[2]{0}', space=sflag, size = 0x8, scoped, tag = 'scoped memory for qnet_forward_padded.1']
    #allocation4 [shape = 's32[2]{0}', space=sflag, size = 0x8, scoped, tag = 'scoped memory for qnet_forward_padded.1']
    #allocation5 [shape = 'u8[24576]{0}', space=vmem, size = 0x6000, scoped, tag = 'output window, operand 0']
    %12 = vsyncpa [#allocation3], 0
    %13 = vsyncpa [#allocation4], 0
    %s14 = scalar_lea.sflag [#allocation4], 1
    %15 = vsyncpa %s14, 0
    loop: start=0, step=1, limit=4
    $region2: #{qnet_forward_padded.1} parent=1 // loop_pre_header
      _
    $region3: #{qnet_forward_padded.1} parent=1 // loop_header
      %s17 = sphi 0, %s21
      %p18 = scmp.ge.s32.totalorder %s17, 4
      %s27 = sphi 0, %s29
      %s30 = sphi 0, %s27
      %s31 = sphi 0, %s30
      %s47 = sphi 0, %s31
      %s51 = sphi 0, %s51
      %s53 = sphi 0, %s51
      %s54 = sphi 0, %s53
      %s68 = sphi 0, %s54
      %s72 = sphi 0, %s72
      %s74 = sphi 0, %s72
      %s75 = sphi 0, %s74
      %s89 = sphi 0, %s75
      %s93 = sphi 0, %s93
      %s95 = sphi 0, %s93
      %s96 = sphi 0, %s95
      %s110 = sphi 0, %s96
      %s114 = sphi 0, %s114
      %s116 = sphi 0, %s114
      %s117 = sphi 0, %s116
      %s131 = sphi 0, %s117
      %s135 = sphi 0, %s135
      %s137 = sphi 0, %s135
      %s138 = sphi 0, %s137
      %s152 = sphi 0, %s138
      %s156 = sphi 0, %s156
      %s158 = sphi 0, %s156
      %s159 = sphi 0, %s158
      %s173 = sphi 0, %s159
      %s179 = sphi 0, %s181
      %s182 = sphi 0, %s179
      %s183 = sphi 0, %s182
      %s199 = sphi 0, %s183
    $region4: #{qnet_forward_padded.1} parent=1 // loop_header_branch
      %20 = sbr.rel (%p18) target = $region8
    $region5: #{qnet_forward_padded.1} parent=1 // loop_body
      %s22 = ssub.s32 %s17, 1
      %s23 = ssub.s32 %s17, 2
      %s24 = sadd.s32 %s17, 1
      %s25 = ssub.s32 %s17, %s24
      %p26 = scmp.eq.s32.totalorder %s25, 0
      %s28 = sadd.s32 %s27, 1
      %s29 = scalar_select %p26, %s27, %s28
      %p32 = pneg %p26
      %p33 = scmp.eq.s32.totalorder %s17, 1
      %p34 = por %p32, %p33
      %p35 = scmp.ne.s32.totalorder %s27, %s30
      %p36 = scmp.eq.s32.totalorder %s17, 0
      %p37 = por %p35, %p36
      %p38 = scmp.ne.s32.totalorder %s27, %s30
      %p39 = scmp.eq.s32.totalorder %s22, 1
      %p40 = por %p38, %p39
      %p41 = scmp.ne.s32.totalorder %s30, %s31
      %p42 = scmp.eq.s32.totalorder %s22, 0
      %p43 = por %p41, %p42
      %p44 = scmp.ne.s32.totalorder %s30, %s31
      %p45 = scmp.eq.s32.totalorder %s23, 1
      %p46 = por %p44, %p45
      %p48 = scmp.ne.s32.totalorder %s31, %s47
      %p49 = scmp.eq.s32.totalorder %s23, 0
      %p50 = por %p48, %p49
      %s52 = sadd.s32 %s51, 1
      %p55 = scmp.eq.s32.totalorder %s17, 1
      %p56 = scmp.ne.s32.totalorder %s51, %s53
      %p57 = scmp.eq.s32.totalorder %s17, 0
      %p58 = por %p56, %p57
      %p59 = scmp.ne.s32.totalorder %s51, %s53
      %p60 = scmp.eq.s32.totalorder %s22, 1
      %p61 = por %p59, %p60
      %p62 = scmp.ne.s32.totalorder %s53, %s54
      %p63 = scmp.eq.s32.totalorder %s22, 0
      %p64 = por %p62, %p63
      %p65 = scmp.ne.s32.totalorder %s53, %s54
      %p66 = scmp.eq.s32.totalorder %s23, 1
      %p67 = por %p65, %p66
      %p69 = scmp.ne.s32.totalorder %s54, %s68
      %p70 = scmp.eq.s32.totalorder %s23, 0
      %p71 = por %p69, %p70
      %s73 = sadd.s32 %s72, 1
      %p76 = scmp.eq.s32.totalorder %s17, 1
      %p77 = scmp.ne.s32.totalorder %s72, %s74
      %p78 = scmp.eq.s32.totalorder %s17, 0
      %p79 = por %p77, %p78
      %p80 = scmp.ne.s32.totalorder %s72, %s74
      %p81 = scmp.eq.s32.totalorder %s22, 1
      %p82 = por %p80, %p81
      %p83 = scmp.ne.s32.totalorder %s74, %s75
      %p84 = scmp.eq.s32.totalorder %s22, 0
      %p85 = por %p83, %p84
      %p86 = scmp.ne.s32.totalorder %s74, %s75
      %p87 = scmp.eq.s32.totalorder %s23, 1
      %p88 = por %p86, %p87
      %p90 = scmp.ne.s32.totalorder %s75, %s89
      %p91 = scmp.eq.s32.totalorder %s23, 0
      %p92 = por %p90, %p91
      %s94 = sadd.s32 %s93, 1
      %p97 = scmp.eq.s32.totalorder %s17, 1
      %p98 = scmp.ne.s32.totalorder %s93, %s95
      %p99 = scmp.eq.s32.totalorder %s17, 0
      %p100 = por %p98, %p99
      %p101 = scmp.ne.s32.totalorder %s93, %s95
      %p102 = scmp.eq.s32.totalorder %s22, 1
      %p103 = por %p101, %p102
      %p104 = scmp.ne.s32.totalorder %s95, %s96
      %p105 = scmp.eq.s32.totalorder %s22, 0
      %p106 = por %p104, %p105
      %p107 = scmp.ne.s32.totalorder %s95, %s96
      %p108 = scmp.eq.s32.totalorder %s23, 1
      %p109 = por %p107, %p108
      %p111 = scmp.ne.s32.totalorder %s96, %s110
      %p112 = scmp.eq.s32.totalorder %s23, 0
      %p113 = por %p111, %p112
      %s115 = sadd.s32 %s114, 1
      %p118 = scmp.eq.s32.totalorder %s17, 1
      %p119 = scmp.ne.s32.totalorder %s114, %s116
      %p120 = scmp.eq.s32.totalorder %s17, 0
      %p121 = por %p119, %p120
      %p122 = scmp.ne.s32.totalorder %s114, %s116
      %p123 = scmp.eq.s32.totalorder %s22, 1
      %p124 = por %p122, %p123
      %p125 = scmp.ne.s32.totalorder %s116, %s117
      %p126 = scmp.eq.s32.totalorder %s22, 0
      %p127 = por %p125, %p126
      %p128 = scmp.ne.s32.totalorder %s116, %s117
      %p129 = scmp.eq.s32.totalorder %s23, 1
      %p130 = por %p128, %p129
      %p132 = scmp.ne.s32.totalorder %s117, %s131
      %p133 = scmp.eq.s32.totalorder %s23, 0
      %p134 = por %p132, %p133
      %s136 = sadd.s32 %s135, 1
      %p139 = scmp.eq.s32.totalorder %s17, 1
      %p140 = scmp.ne.s32.totalorder %s135, %s137
      %p141 = scmp.eq.s32.totalorder %s17, 0
      %p142 = por %p140, %p141
      %p143 = scmp.ne.s32.totalorder %s135, %s137
      %p144 = scmp.eq.s32.totalorder %s22, 1
      %p145 = por %p143, %p144
      %p146 = scmp.ne.s32.totalorder %s137, %s138
      %p147 = scmp.eq.s32.totalorder %s22, 0
      %p148 = por %p146, %p147
      %p149 = scmp.ne.s32.totalorder %s137, %s138
      %p150 = scmp.eq.s32.totalorder %s23, 1
      %p151 = por %p149, %p150
      %p153 = scmp.ne.s32.totalorder %s138, %s152
      %p154 = scmp.eq.s32.totalorder %s23, 0
      %p155 = por %p153, %p154
      %s157 = sadd.s32 %s156, 1
      %p160 = scmp.eq.s32.totalorder %s17, 1
      %p161 = scmp.ne.s32.totalorder %s156, %s158
      %p162 = scmp.eq.s32.totalorder %s17, 0
      %p163 = por %p161, %p162
      %p164 = scmp.ne.s32.totalorder %s156, %s158
      %p165 = scmp.eq.s32.totalorder %s22, 1
      %p166 = por %p164, %p165
      %p167 = scmp.ne.s32.totalorder %s158, %s159
      %p168 = scmp.eq.s32.totalorder %s22, 0
      %p169 = por %p167, %p168
      %p170 = scmp.ne.s32.totalorder %s158, %s159
      %p171 = scmp.eq.s32.totalorder %s23, 1
      %p172 = por %p170, %p171
      %p174 = scmp.ne.s32.totalorder %s159, %s173
      %p175 = scmp.eq.s32.totalorder %s23, 0
      %p176 = por %p174, %p175
      %s177 = ssub.s32 %s17, %s24
      %p178 = scmp.eq.s32.totalorder %s177, 0
      %s180 = sadd.s32 %s179, 1
      %s181 = scalar_select %p178, %s179, %s180
      %p184 = pneg %p178
      %p185 = scmp.eq.s32.totalorder %s17, 1
      %p186 = por %p184, %p185
      %p187 = scmp.ne.s32.totalorder %s179, %s182
      %p188 = scmp.eq.s32.totalorder %s17, 0
      %p189 = por %p187, %p188
      %p190 = scmp.ne.s32.totalorder %s179, %s182
      %p191 = scmp.eq.s32.totalorder %s22, 1
      %p192 = por %p190, %p191
      %p193 = scmp.ne.s32.totalorder %s182, %s183
      %p194 = scmp.eq.s32.totalorder %s22, 0
      %p195 = por %p193, %p194
      %p196 = scmp.ne.s32.totalorder %s182, %s183
      %p197 = scmp.eq.s32.totalorder %s23, 1
      %p198 = por %p196, %p197
      %p200 = scmp.ne.s32.totalorder %s183, %s199
      %p201 = scmp.eq.s32.totalorder %s23, 0
      %p202 = por %p200, %p201
      %p203 = scmp.le.s32.totalorder 1, %s17
      %p204 = scmp.lt.s32.totalorder %s17, 3
      %p205 = pnand %p203, %p204
      %p206 = pneg %p205
      // Predicated region
      $region9: #{qnet_forward_padded.1} parent=5 // pred_check
        _
      $region10: #{qnet_forward_padded.1} parent=5 // pred_check_branch
        %208 = sbr.rel (%p205) target = $region12
      $region11: #{qnet_forward_padded.1} parent=5 // pred_region
        %s209 = ssub.s32 %s17, 1
        // Predicated region
        $region13: #{qnet_forward_padded.1} parent=11 // pred_check
          %p210 = pneg %p64
        $region14: #{qnet_forward_padded.1} parent=11 // pred_check_branch
          %212 = sbr.rel (%p210) target = $region16
        $region15: #{qnet_forward_padded.1} parent=11 // pred_region
          _
        $region16: #{qnet_forward_padded.1} parent=11 // pred_fallthru
          _
        // Predicated region
        $region17: #{qnet_forward_padded.1} parent=11 // pred_check
          %p213 = pneg %p85
        $region18: #{qnet_forward_padded.1} parent=11 // pred_check_branch
          %215 = sbr.rel (%p213) target = $region20
        $region19: #{qnet_forward_padded.1} parent=11 // pred_region
          _
        $region20: #{qnet_forward_padded.1} parent=11 // pred_fallthru
          _
        // Predicated region
        $region21: #{qnet_forward_padded.1} parent=11 // pred_check
          %p216 = pneg %p106
        $region22: #{qnet_forward_padded.1} parent=11 // pred_check_branch
          %218 = sbr.rel (%p216) target = $region24
        $region23: #{qnet_forward_padded.1} parent=11 // pred_region
          %s220 = ssub.s32 32768, 32768
          %221 = vsyncadd [#allocation3], %s220
          %s222 = sshll.u32 [#allocation2], 4
          %s223 = int_to_ptr.vmem [resolvable:$true] %s222
          %228 = dma.hbm_to_vmem [thread:$0]  %s3, 32768, %s223, [#allocation3], 256, 256, 16
        $region24: #{qnet_forward_padded.1} parent=11 // pred_fallthru
          _
        // Predicated region
        $region25: #{qnet_forward_padded.1} parent=11 // pred_check
          %p229 = pneg %p127
        $region26: #{qnet_forward_padded.1} parent=11 // pred_check_branch
          %231 = sbr.rel (%p229) target = $region28
        $region27: #{qnet_forward_padded.1} parent=11 // pred_region
          _
        $region28: #{qnet_forward_padded.1} parent=11 // pred_fallthru
          _
        // Predicated region
        $region29: #{qnet_forward_padded.1} parent=11 // pred_check
          %p232 = pneg %p148
        $region30: #{qnet_forward_padded.1} parent=11 // pred_check_branch
          %234 = sbr.rel (%p232) target = $region32
        $region31: #{qnet_forward_padded.1} parent=11 // pred_region
          _
        $region32: #{qnet_forward_padded.1} parent=11 // pred_fallthru
          _
        // Predicated region
        $region33: #{qnet_forward_padded.1} parent=11 // pred_check
          %p235 = pneg %p169
        $region34: #{qnet_forward_padded.1} parent=11 // pred_check_branch
          %237 = sbr.rel (%p235) target = $region36
        $region35: #{qnet_forward_padded.1} parent=11 // pred_region
          _
        $region36: #{qnet_forward_padded.1} parent=11 // pred_fallthru
          _
      $region12: #{qnet_forward_padded.1} parent=5 // pred_fallthru
        _
      %p238 = scmp.lt.s32.totalorder %s17, 2
      // Predicated region
      $region37: #{qnet_forward_padded.1} parent=5 // pred_check
        %p239 = pneg %p238
      $region38: #{qnet_forward_padded.1} parent=5 // pred_check_branch
        %241 = sbr.rel (%p239) target = $region40
      $region39: #{qnet_forward_padded.1} parent=5 // pred_region
        // Predicated region
        $region41: #{qnet_forward_padded.1} parent=39 // pred_check
          %p242 = pneg %p37
        $region42: #{qnet_forward_padded.1} parent=39 // pred_check_branch
          %244 = sbr.rel (%p242) target = $region44
        $region43: #{qnet_forward_padded.1} parent=39 // pred_region
          %s245 = smul.u32 3, %s17
          %s246 = ssub.s32 5, %s245
          %p247 = scmp.lt.s32.totalorder %s246, 3
          %s248 = scalar_select %p247, %s246, 3
          %s249 = smul.u32 128, %s248
          %p250 = scmp.lt.s32.totalorder %s245, 4
          %s251 = scalar_select %p250, %s245, 4
          %s252 = smul.addr %s251, 8
          %s253 = scalar_lea.vmem %s0, %s252
          %s254 = smul.u32 3, %s17
          %s255 = ssub.s32 5, %s254
          %p256 = scmp.lt.s32.totalorder %s255, 3
          %s257 = scalar_select %p256, %s255, 3
          %s258 = smul.u32 128, %s257
        $region44: #{qnet_forward_padded.1} parent=39 // pred_fallthru
          _
      $region40: #{qnet_forward_padded.1} parent=5 // pred_fallthru
        _
      %p259 = scmp.le.s32.totalorder 1, %s17
      %p260 = scmp.lt.s32.totalorder %s17, 3
      %p261 = pnand %p259, %p260
      %p262 = pneg %p261
      // Predicated region
      $region45: #{qnet_forward_padded.1} parent=5 // pred_check
        _
      $region46: #{qnet_forward_padded.1} parent=5 // pred_check_branch
        %264 = sbr.rel (%p261) target = $region48
      $region47: #{qnet_forward_padded.1} parent=5 // pred_region
        %s265 = ssub.s32 %s17, 1
        // Predicated region
        $region49: #{qnet_forward_padded.1} parent=47 // pred_check
          %p266 = pneg %p106
        $region50: #{qnet_forward_padded.1} parent=47 // pred_check_branch
          %268 = sbr.rel (%p266) target = $region52
        $region51: #{qnet_forward_padded.1} parent=47 // pred_region
          %269 = dma.done [#allocation3], 32768
        $region52: #{qnet_forward_padded.1} parent=47 // pred_fallthru
          _
        %s270 = smul.u32 3, %s22
        %s271 = ssub.s32 5, %s270
        %p272 = scmp.lt.s32.totalorder %s271, 3
        %s273 = scalar_select %p272, %s271, 3
        %s274 = smul.u32 128, %s273
        %p275 = scmp.lt.s32.totalorder %s270, 4
        %s276 = scalar_select %p275, %s270, 4
        %s277 = smul.addr %s276, 8
        %s278 = scalar_lea.vmem %s0, %s277
        %p279 = pneg %p43
        %p280 = pneg %p40
        %p281 = pneg %p64
        %p282 = pneg %p61
        %p283 = pneg %p85
        %p284 = pneg %p82
        %p285 = pneg %p106
        %p286 = pneg %p103
        %p287 = pneg %p127
        %p288 = pneg %p124
        %p289 = pneg %p148
        %p290 = pneg %p145
        %p291 = pneg %p169
        %p292 = pneg %p166
        %p293 = pneg %p195
        %p294 = pneg %p192
        %s295 = sand.u32 %s182, 1
        %s296 = scalar_lea.sflag [#allocation4], %s295
        %s297 = sand.u32 %s182, 1
        %s298 = smul.addr %s297, 24
        %s299 = scalar_lea.vmem [#allocation5], %s298
        %s300 = smul.u32 3, %s22
        %s301 = ssub.s32 5, %s300
        %p302 = scmp.lt.s32.totalorder %s301, 3
        %s303 = scalar_select %p302, %s301, 3
        %s304 = smul.u32 128, %s303
        %p305 = scmp.lt.s32.totalorder %s300, 4
        %s306 = scalar_select %p305, %s300, 4
        %s307 = smul.addr %s306, 8
        %s308 = scalar_lea.vmem %s0, %s307
        %s309 = smul.u32 3, %s22
        %s310 = ssub.s32 5, %s309
        %p311 = scmp.lt.s32.totalorder %s310, 3
        %s312 = scalar_select %p311, %s310, 3
        %s313 = smul.u32 128, %s312
        %s314 = smul.u32 3, %s22
        %s315 = ssub.s32 5, %s314
        %p316 = scmp.lt.s32.totalorder %s315, 3
        %s317 = scalar_select %p316, %s315, 3
        %s318 = smul.u32 128, %s317
        %v320 = vld [vmem:[%s308] sm:$0xff]
        %v321 = vld [vmem:[%s308 + $0x8] sm:$0xff]
        %v322 = vld [vmem:[%s308 + $0x10] sm:$0xff]
        %v323 = vpack.c.bf16 %v321, %v320
        %v324 = vpack.c.bf16 %v322, %v322
        %v325 = vld [vmem:[%s1] sm:$0xff]
        %v326 = vld [vmem:[%s1 + $0x8] sm:$0xff]
        %v327 = vld [vmem:[%s1 + $0x10] sm:$0xff]
        %v328 = vld [vmem:[%s1 + $0x18] sm:$0xff]
        %v329 = vld [vmem:[%s1 + $0x20] sm:$0xff]
        %v330 = vld [vmem:[%s1 + $0x28] sm:$0xff]
        %v331 = vld [vmem:[%s1 + $0x30] sm:$0xff]
        %v332 = vld [vmem:[%s1 + $0x38] sm:$0xff]
        %v333 = vld [vmem:[%s1 + $0x40] sm:$0xff]
        %v334 = vld [vmem:[%s1 + $0x48] sm:$0xff]
        %v335 = vld [vmem:[%s1 + $0x50] sm:$0xff]
        %v336 = vld [vmem:[%s1 + $0x58] sm:$0xff]
        %v337 = vld [vmem:[%s1 + $0x60] sm:$0xff]
        %v338 = vld [vmem:[%s1 + $0x68] sm:$0xff]
        %v339 = vld [vmem:[%s1 + $0x70] sm:$0xff]
        %v340 = vld [vmem:[%s1 + $0x78] sm:$0xff]
        %v341 = vld [vmem:[%s2] sm:$0xff]
        %v343 = vlaneseq
        %v344 = vshrl.u32 %v343, 7
        %v345 = vsub.s32 0, %v344
        %v346 = vrot.slane %v341, %v345
        %v347 = vlaneseq
        %v348 = vshrl.u32 %v347, 7
        %v349 = vsub.s32 1, %v348
        %v350 = vrot.slane %v341, %v349
        %v351 = vlaneseq
        %v352 = vshrl.u32 %v351, 7
        %v353 = vsub.s32 2, %v352
        %v354 = vrot.slane %v341, %v353
        %v355 = vlaneseq
        %v356 = vshrl.u32 %v355, 7
        %v357 = vsub.s32 3, %v356
        %v358 = vrot.slane %v341, %v357
        %v359 = vlaneseq
        %v360 = vshrl.u32 %v359, 7
        %v361 = vsub.s32 4, %v360
        %v362 = vrot.slane %v341, %v361
        %v363 = vlaneseq
        %v364 = vshrl.u32 %v363, 7
        %v365 = vsub.s32 5, %v364
        %v366 = vrot.slane %v341, %v365
        %v367 = vlaneseq
        %v368 = vshrl.u32 %v367, 7
        %v369 = vsub.s32 6, %v368
        %v370 = vrot.slane %v341, %v369
        %v371 = vlaneseq
        %v372 = vshrl.u32 %v371, 7
        %v373 = vsub.s32 7, %v372
        %v374 = vrot.slane %v341, %v373
        %v399 = vunpack.c.l.b16 %v325
        %v400 = vunpack.c.h.b16 %v325
        %v401 = vunpack.c.l.b16 %v326
        %v402 = vunpack.c.h.b16 %v326
        %v403 = vunpack.c.l.b16 %v327
        %v404 = vunpack.c.h.b16 %v327
        %v405 = vunpack.c.l.b16 %v328
        %v406 = vunpack.c.h.b16 %v328
        %v407 = vunpack.c.l.b16 %v329
        %v408 = vunpack.c.h.b16 %v329
        %v409 = vunpack.c.l.b16 %v330
        %v410 = vunpack.c.h.b16 %v330
        %v411 = vunpack.c.l.b16 %v331
        %v412 = vunpack.c.h.b16 %v331
        %v413 = vunpack.c.l.b16 %v332
        %v414 = vunpack.c.h.b16 %v332
        %v415 = vunpack.c.l.b16 %v333
        %v416 = vunpack.c.h.b16 %v333
        %v417 = vunpack.c.l.b16 %v334
        %v418 = vunpack.c.h.b16 %v334
        %v419 = vunpack.c.l.b16 %v335
        %v420 = vunpack.c.h.b16 %v335
        %v421 = vunpack.c.l.b16 %v336
        %v422 = vunpack.c.h.b16 %v336
        %v423 = vunpack.c.l.b16 %v337
        %v424 = vunpack.c.h.b16 %v337
        %v425 = vunpack.c.l.b16 %v338
        %v426 = vunpack.c.h.b16 %v338
        %v427 = vunpack.c.l.b16 %v339
        %v428 = vunpack.c.h.b16 %v339
        %v429 = vunpack.c.l.b16 %v340
        %v430 = vunpack.c.h.b16 %v340
        %v431 = vpack.c.b16 %v407, %v399
        %v432 = vpack.c.b16 %v408, %v400
        %v433 = vpack.c.b16 %v409, %v401
        %v434 = vpack.c.b16 %v410, %v402
        %v435 = vpack.c.b16 %v411, %v403
        %v436 = vpack.c.b16 %v412, %v404
        %v437 = vpack.c.b16 %v413, %v405
        %v438 = vpack.c.b16 %v414, %v406
        %v439 = vpack.c.b16 %v423, %v415
        %v440 = vpack.c.b16 %v424, %v416
        %v441 = vpack.c.b16 %v425, %v417
        %v442 = vpack.c.b16 %v426, %v418
        %v443 = vpack.c.b16 %v427, %v419
        %v444 = vpack.c.b16 %v428, %v420
        %v445 = vpack.c.b16 %v429, %v421
        %v446 = vpack.c.b16 %v430, %v422
        %vm463 = vcmask 261120
        %v465 = vsel %vm463, %v323, 0
        %v468 = vsel %vm463, %v324, 0
        %470 = vmatprep.subr.bf16.mxu0 %v432
        %471 = vmatpush1.bf16.msra.mxu0 %v431
        %472 = vmatprep.subr.bf16.mxu0 %v440
        %473 = vmatpush1.bf16.msra.mxu0 %v439
        %474 = vmatprep.subr.bf16.mxu0 0
        %475 = vmatpush1.bf16.msra.mxu0 0
        %476 = vmatprep.subr.bf16.mxu0 0
        %477 = vmatpush1.bf16.msra.mxu0 0
        %478 = vmatprep.subr.bf16.mxu0 0
        %479 = vmatpush1.bf16.msra.mxu0 0
        %480 = vmatprep.subr.bf16.mxu0 0
        %481 = vmatpush1.bf16.msra.mxu0 0
        %482 = vmatprep.subr.bf16.mxu0 0
        %483 = vmatpush1.bf16.msra.mxu0 0
        %484 = vmatprep.subr.bf16.mxu0 0
        %485 = vmatpush1.bf16.msra.mxu0 0
        %486 = vmatprep.subr.bf16.mxu0 0
        %487 = vmatpush1.bf16.msra.mxu0 0
        %488 = vmatprep.subr.bf16.mxu0 0
        %489 = vmatpush1.bf16.msra.mxu0 0
        %490 = vmatprep.subr.bf16.mxu0 0
        %491 = vmatpush1.bf16.msra.mxu0 0
        %492 = vmatprep.subr.bf16.mxu0 0
        %493 = vmatpush1.bf16.msra.mxu0 0
        %494 = vmatprep.subr.bf16.mxu0 0
        %495 = vmatpush1.bf16.msra.mxu0 0
        %496 = vmatprep.subr.bf16.mxu0 0
        %497 = vmatpush1.bf16.msra.mxu0 0
        %498 = vmatprep.subr.bf16.mxu0 0
        %499 = vmatpush1.bf16.msra.mxu0 0
        %500 = vmatprep.subr.bf16.mxu0 0
        %501 = vmatpush1.bf16.msra.mxu0 0
        %502 = vmatprep.mubr.bf16.mxu0 0
        %503 = vmatmul.mubr.bf16.gmra.mrb[0].mxu0 %v465
        %v504 = vpop.f32.mrb[0].mxu0
        %v505 = vadd.f32 %v346, %v504
        %v506 = vpop.f32.mrb[0].mxu0
        %v507 = vadd.f32 %v350, %v506
        %v508 = vpop.f32.mrb[0].mxu0
        %v509 = vadd.f32 %v346, %v508
        %v510 = vpop.f32.mrb[0].mxu0
        %v511 = vadd.f32 %v350, %v510
        %512 = vmatprep.mubr.bf16.mxu0 0
        %513 = vmatmul.mubr.bf16.gmra.mrb[0].mxu0 %v468
        %v514 = vpop.f32.mrb[0].mxu0
        %v515 = vadd.f32 %v346, %v514
        %v516 = vpop.f32.mrb[0].mxu0
        %v517 = vadd.f32 %v350, %v516
        %v518 = vpop.f32.mrb[0].mxu0
        %v519 = vpop.f32.mrb[0].mxu0
        %520 = vdwg.mxu0
        %521 = vmatprep.subr.bf16.mxu0 %v434
        %522 = vmatpush1.bf16.msra.mxu0 %v433
        %523 = vmatprep.subr.bf16.mxu0 %v442
        %524 = vmatpush1.bf16.msra.mxu0 %v441
        %525 = vmatprep.subr.bf16.mxu0 0
        %526 = vmatpush1.bf16.msra.mxu0 0
        %527 = vmatprep.subr.bf16.mxu0 0
        %528 = vmatpush1.bf16.msra.mxu0 0
        %529 = vmatprep.subr.bf16.mxu0 0
        %530 = vmatpush1.bf16.msra.mxu0 0
        %531 = vmatprep.subr.bf16.mxu0 0
        %532 = vmatpush1.bf16.msra.mxu0 0
        %533 = vmatprep.subr.bf16.mxu0 0
        %534 = vmatpush1.bf16.msra.mxu0 0
        %535 = vmatprep.subr.bf16.mxu0 0
        %536 = vmatpush1.bf16.msra.mxu0 0
        %537 = vmatprep.subr.bf16.mxu0 0
        %538 = vmatpush1.bf16.msra.mxu0 0
        %539 = vmatprep.subr.bf16.mxu0 0
        %540 = vmatpush1.bf16.msra.mxu0 0
        %541 = vmatprep.subr.bf16.mxu0 0
        %542 = vmatpush1.bf16.msra.mxu0 0
        %543 = vmatprep.subr.bf16.mxu0 0
        %544 = vmatpush1.bf16.msra.mxu0 0
        %545 = vmatprep.subr.bf16.mxu0 0
        %546 = vmatpush1.bf16.msra.mxu0 0
        %547 = vmatprep.subr.bf16.mxu0 0
        %548 = vmatpush1.bf16.msra.mxu0 0
        %549 = vmatprep.subr.bf16.mxu0 0
        %550 = vmatpush1.bf16.msra.mxu0 0
        %551 = vmatprep.subr.bf16.mxu0 0
        %552 = vmatpush1.bf16.msra.mxu0 0
        %553 = vmatprep.mubr.bf16.mxu0 0
        %554 = vmatmul.mubr.bf16.gmra.mrb[0].mxu0 %v465
        %v555 = vpop.f32.mrb[0].mxu0
        %v556 = vadd.f32 %v354, %v555
        %v557 = vpop.f32.mrb[0].mxu0
        %v558 = vadd.f32 %v358, %v557
        %v559 = vpop.f32.mrb[0].mxu0
        %v560 = vadd.f32 %v354, %v559
        %v561 = vpop.f32.mrb[0].mxu0
        %v562 = vadd.f32 %v358, %v561
        %563 = vmatprep.mubr.bf16.mxu0 0
        %564 = vmatmul.mubr.bf16.gmra.mrb[0].mxu0 %v468
        %v565 = vpop.f32.mrb[0].mxu0
        %v566 = vadd.f32 %v354, %v565
        %v567 = vpop.f32.mrb[0].mxu0
        %v568 = vadd.f32 %v358, %v567
        %v569 = vpop.f32.mrb[0].mxu0
        %v570 = vpop.f32.mrb[0].mxu0
        %571 = vdwg.mxu0
        %572 = vmatprep.subr.bf16.mxu0 %v436
        %573 = vmatpush1.bf16.msra.mxu0 %v435
        %574 = vmatprep.subr.bf16.mxu0 %v444
        %575 = vmatpush1.bf16.msra.mxu0 %v443
        %576 = vmatprep.subr.bf16.mxu0 0
        %577 = vmatpush1.bf16.msra.mxu0 0
        %578 = vmatprep.subr.bf16.mxu0 0
        %579 = vmatpush1.bf16.msra.mxu0 0
        %580 = vmatprep.subr.bf16.mxu0 0
        %581 = vmatpush1.bf16.msra.mxu0 0
        %582 = vmatprep.subr.bf16.mxu0 0
        %583 = vmatpush1.bf16.msra.mxu0 0
        %584 = vmatprep.subr.bf16.mxu0 0
        %585 = vmatpush1.bf16.msra.mxu0 0
        %586 = vmatprep.subr.bf16.mxu0 0
        %587 = vmatpush1.bf16.msra.mxu0 0
        %588 = vmatprep.subr.bf16.mxu0 0
        %589 = vmatpush1.bf16.msra.mxu0 0
        %590 = vmatprep.subr.bf16.mxu0 0
        %591 = vmatpush1.bf16.msra.mxu0 0
        %592 = vmatprep.subr.bf16.mxu0 0
        %593 = vmatpush1.bf16.msra.mxu0 0
        %594 = vmatprep.subr.bf16.mxu0 0
        %595 = vmatpush1.bf16.msra.mxu0 0
        %596 = vmatprep.subr.bf16.mxu0 0
        %597 = vmatpush1.bf16.msra.mxu0 0
        %598 = vmatprep.subr.bf16.mxu0 0
        %599 = vmatpush1.bf16.msra.mxu0 0
        %600 = vmatprep.subr.bf16.mxu0 0
        %601 = vmatpush1.bf16.msra.mxu0 0
        %602 = vmatprep.subr.bf16.mxu0 0
        %603 = vmatpush1.bf16.msra.mxu0 0
        %604 = vmatprep.mubr.bf16.mxu0 0
        %605 = vmatmul.mubr.bf16.gmra.mrb[0].mxu0 %v465
        %v606 = vpop.f32.mrb[0].mxu0
        %v607 = vadd.f32 %v362, %v606
        %v608 = vpop.f32.mrb[0].mxu0
        %v609 = vadd.f32 %v366, %v608
        %v610 = vpop.f32.mrb[0].mxu0
        %v611 = vadd.f32 %v362, %v610
        %v612 = vpop.f32.mrb[0].mxu0
        %v613 = vadd.f32 %v366, %v612
        %614 = vmatprep.mubr.bf16.mxu0 0
        %615 = vmatmul.mubr.bf16.gmra.mrb[0].mxu0 %v468
        %v616 = vpop.f32.mrb[0].mxu0
        %v617 = vadd.f32 %v362, %v616
        %v618 = vpop.f32.mrb[0].mxu0
        %v619 = vadd.f32 %v366, %v618
        %v620 = vpop.f32.mrb[0].mxu0
        %v621 = vpop.f32.mrb[0].mxu0
        %622 = vdwg.mxu0
        %623 = vmatprep.subr.bf16.mxu0 %v438
        %624 = vmatpush1.bf16.msra.mxu0 %v437
        %625 = vmatprep.subr.bf16.mxu0 %v446
        %626 = vmatpush1.bf16.msra.mxu0 %v445
        %627 = vmatprep.subr.bf16.mxu0 0
        %628 = vmatpush1.bf16.msra.mxu0 0
        %629 = vmatprep.subr.bf16.mxu0 0
        %630 = vmatpush1.bf16.msra.mxu0 0
        %631 = vmatprep.subr.bf16.mxu0 0
        %632 = vmatpush1.bf16.msra.mxu0 0
        %633 = vmatprep.subr.bf16.mxu0 0
        %634 = vmatpush1.bf16.msra.mxu0 0
        %635 = vmatprep.subr.bf16.mxu0 0
        %636 = vmatpush1.bf16.msra.mxu0 0
        %637 = vmatprep.subr.bf16.mxu0 0
        %638 = vmatpush1.bf16.msra.mxu0 0
        %639 = vmatprep.subr.bf16.mxu0 0
        %640 = vmatpush1.bf16.msra.mxu0 0
        %641 = vmatprep.subr.bf16.mxu0 0
        %642 = vmatpush1.bf16.msra.mxu0 0
        %643 = vmatprep.subr.bf16.mxu0 0
        %644 = vmatpush1.bf16.msra.mxu0 0
        %645 = vmatprep.subr.bf16.mxu0 0
        %646 = vmatpush1.bf16.msra.mxu0 0
        %647 = vmatprep.subr.bf16.mxu0 0
        %648 = vmatpush1.bf16.msra.mxu0 0
        %649 = vmatprep.subr.bf16.mxu0 0
        %650 = vmatpush1.bf16.msra.mxu0 0
        %651 = vmatprep.subr.bf16.mxu0 0
        %652 = vmatpush1.bf16.msra.mxu0 0
        %653 = vmatprep.subr.bf16.mxu0 0
        %654 = vmatpush1.bf16.msra.mxu0 0
        %655 = vmatprep.mubr.bf16.mxu0 0
        %656 = vmatmul.mubr.bf16.gmra.mrb[0].mxu0 %v465
        %v657 = vpop.f32.mrb[0].mxu0
        %v658 = vadd.f32 %v370, %v657
        %v659 = vpop.f32.mrb[0].mxu0
        %v660 = vadd.f32 %v374, %v659
        %v661 = vpop.f32.mrb[0].mxu0
        %v662 = vadd.f32 %v370, %v661
        %v663 = vpop.f32.mrb[0].mxu0
        %v664 = vadd.f32 %v374, %v663
        %665 = vmatprep.mubr.bf16.mxu0 0
        %666 = vmatmul.mubr.bf16.gmra.mrb[0].mxu0 %v468
        %v667 = vpop.f32.mrb[0].mxu0
        %v668 = vadd.f32 %v370, %v667
        %v669 = vpop.f32.mrb[0].mxu0
        %v670 = vadd.f32 %v374, %v669
        %v671 = vpop.f32.mrb[0].mxu0
        %v672 = vpop.f32.mrb[0].mxu0
        %673 = vdwg.mxu0
        %v674 = vpack.c.bf16 %v509, %v505
        %v675 = vpack.c.bf16 %v511, %v507
        %v676 = vpack.c.bf16 %v560, %v556
        %v677 = vpack.c.bf16 %v562, %v558
        %v678 = vpack.c.bf16 %v611, %v607
        %v679 = vpack.c.bf16 %v613, %v609
        %v680 = vpack.c.bf16 %v662, %v658
        %v681 = vpack.c.bf16 %v664, %v660
        %v682 = vpack.c.bf16 %v515, %v515
        %v683 = vpack.c.bf16 %v517, %v517
        %v684 = vpack.c.bf16 %v566, %v566
        %v685 = vpack.c.bf16 %v568, %v568
        %v686 = vpack.c.bf16 %v617, %v617
        %v687 = vpack.c.bf16 %v619, %v619
        %v688 = vpack.c.bf16 %v668, %v668
        %v689 = vpack.c.bf16 %v670, %v670
        %v690 = vld [vmem:[#allocation2] sm:$0xff]
        %v691 = vld [vmem:[#allocation2 + $0x8] sm:$0xff]
        %v692 = vld [vmem:[#allocation2 + $0x10] sm:$0xff]
        %v693 = vld [vmem:[#allocation2 + $0x18] sm:$0xff]
        %v694 = vld [vmem:[#allocation2 + $0x20] sm:$0xff]
        %v695 = vld [vmem:[#allocation2 + $0x28] sm:$0xff]
        %v696 = vld [vmem:[#allocation2 + $0x30] sm:$0xff]
        %v697 = vld [vmem:[#allocation2 + $0x38] sm:$0xff]
        %v698 = vld [vmem:[#allocation2 + $0x40] sm:$0xff]
        %v699 = vld [vmem:[#allocation2 + $0x48] sm:$0xff]
        %v700 = vld [vmem:[#allocation2 + $0x50] sm:$0xff]
        %v701 = vld [vmem:[#allocation2 + $0x58] sm:$0xff]
        %v702 = vld [vmem:[#allocation2 + $0x60] sm:$0xff]
        %v703 = vld [vmem:[#allocation2 + $0x68] sm:$0xff]
        %v704 = vld [vmem:[#allocation2 + $0x70] sm:$0xff]
        %v705 = vld [vmem:[#allocation2 + $0x78] sm:$0xff]
        %v706 = vld [vmem:[#allocation2 + $0x80] sm:$0xff]
        %v707 = vld [vmem:[#allocation2 + $0x88] sm:$0xff]
        %v708 = vld [vmem:[#allocation2 + $0x90] sm:$0xff]
        %v709 = vld [vmem:[#allocation2 + $0x98] sm:$0xff]
        %v710 = vld [vmem:[#allocation2 + $0xa0] sm:$0xff]
        %v711 = vld [vmem:[#allocation2 + $0xa8] sm:$0xff]
        %v712 = vld [vmem:[#allocation2 + $0xb0] sm:$0xff]
        %v713 = vld [vmem:[#allocation2 + $0xb8] sm:$0xff]
        %v714 = vld [vmem:[#allocation2 + $0xc0] sm:$0xff]
        %v715 = vld [vmem:[#allocation2 + $0xc8] sm:$0xff]
        %v716 = vld [vmem:[#allocation2 + $0xd0] sm:$0xff]
        %v717 = vld [vmem:[#allocation2 + $0xd8] sm:$0xff]
        %v718 = vld [vmem:[#allocation2 + $0xe0] sm:$0xff]
        %v719 = vld [vmem:[#allocation2 + $0xe8] sm:$0xff]
        %v720 = vld [vmem:[#allocation2 + $0xf0] sm:$0xff]
        %v721 = vld [vmem:[#allocation2 + $0xf8] sm:$0xff]
        %v722 = vld [vmem:[#allocation2 + $0x100] sm:$0xff]
        %v723 = vld [vmem:[#allocation2 + $0x108] sm:$0xff]
        %v724 = vld [vmem:[#allocation2 + $0x110] sm:$0xff]
        %v725 = vld [vmem:[#allocation2 + $0x118] sm:$0xff]
        %v726 = vld [vmem:[#allocation2 + $0x120] sm:$0xff]
        %v727 = vld [vmem:[#allocation2 + $0x128] sm:$0xff]
        %v728 = vld [vmem:[#allocation2 + $0x130] sm:$0xff]
        %v729 = vld [vmem:[#allocation2 + $0x138] sm:$0xff]
        %v730 = vld [vmem:[#allocation2 + $0x140] sm:$0xff]
        %v731 = vld [vmem:[#allocation2 + $0x148] sm:$0xff]
        %v732 = vld [vmem:[#allocation2 + $0x150] sm:$0xff]
        %v733 = vld [vmem:[#allocation2 + $0x158] sm:$0xff]
        %v734 = vld [vmem:[#allocation2 + $0x160] sm:$0xff]
        %v735 = vld [vmem:[#allocation2 + $0x168] sm:$0xff]
        %v736 = vld [vmem:[#allocation2 + $0x170] sm:$0xff]
        %v737 = vld [vmem:[#allocation2 + $0x178] sm:$0xff]
        %v738 = vld [vmem:[#allocation2 + $0x180] sm:$0xff]
        %v739 = vld [vmem:[#allocation2 + $0x188] sm:$0xff]
        %v740 = vld [vmem:[#allocation2 + $0x190] sm:$0xff]
        %v741 = vld [vmem:[#allocation2 + $0x198] sm:$0xff]
        %v742 = vld [vmem:[#allocation2 + $0x1a0] sm:$0xff]
        %v743 = vld [vmem:[#allocation2 + $0x1a8] sm:$0xff]
        %v744 = vld [vmem:[#allocation2 + $0x1b0] sm:$0xff]
        %v745 = vld [vmem:[#allocation2 + $0x1b8] sm:$0xff]
        %v746 = vld [vmem:[#allocation2 + $0x1c0] sm:$0xff]
        %v747 = vld [vmem:[#allocation2 + $0x1c8] sm:$0xff]
        %v748 = vld [vmem:[#allocation2 + $0x1d0] sm:$0xff]
        %v749 = vld [vmem:[#allocation2 + $0x1d8] sm:$0xff]
        %v750 = vld [vmem:[#allocation2 + $0x1e0] sm:$0xff]
        %v751 = vld [vmem:[#allocation2 + $0x1e8] sm:$0xff]
        %v752 = vld [vmem:[#allocation2 + $0x1f0] sm:$0xff]
        %v753 = vld [vmem:[#allocation2 + $0x1f8] sm:$0xff]
        %v754 = vld [vmem:[#allocation2 + $0x200] sm:$0xff]
        %v755 = vld [vmem:[#allocation2 + $0x208] sm:$0xff]
        %v756 = vld [vmem:[#allocation2 + $0x210] sm:$0xff]
        %v757 = vld [vmem:[#allocation2 + $0x218] sm:$0xff]
        %v758 = vld [vmem:[#allocation2 + $0x220] sm:$0xff]
        %v759 = vld [vmem:[#allocation2 + $0x228] sm:$0xff]
        %v760 = vld [vmem:[#allocation2 + $0x230] sm:$0xff]
        %v761 = vld [vmem:[#allocation2 + $0x238] sm:$0xff]
        %v762 = vld [vmem:[#allocation2 + $0x240] sm:$0xff]
        %v763 = vld [vmem:[#allocation2 + $0x248] sm:$0xff]
        %v764 = vld [vmem:[#allocation2 + $0x250] sm:$0xff]
        %v765 = vld [vmem:[#allocation2 + $0x258] sm:$0xff]
        %v766 = vld [vmem:[#allocation2 + $0x260] sm:$0xff]
        %v767 = vld [vmem:[#allocation2 + $0x268] sm:$0xff]
        %v768 = vld [vmem:[#allocation2 + $0x270] sm:$0xff]
        %v769 = vld [vmem:[#allocation2 + $0x278] sm:$0xff]
        %v770 = vld [vmem:[#allocation2 + $0x280] sm:$0xff]
        %v771 = vld [vmem:[#allocation2 + $0x288] sm:$0xff]
        %v772 = vld [vmem:[#allocation2 + $0x290] sm:$0xff]
        %v773 = vld [vmem:[#allocation2 + $0x298] sm:$0xff]
        %v774 = vld [vmem:[#allocation2 + $0x2a0] sm:$0xff]
        %v775 = vld [vmem:[#allocation2 + $0x2a8] sm:$0xff]
        %v776 = vld [vmem:[#allocation2 + $0x2b0] sm:$0xff]
        %v777 = vld [vmem:[#allocation2 + $0x2b8] sm:$0xff]
        %v778 = vld [vmem:[#allocation2 + $0x2c0] sm:$0xff]
        %v779 = vld [vmem:[#allocation2 + $0x2c8] sm:$0xff]
        %v780 = vld [vmem:[#allocation2 + $0x2d0] sm:$0xff]
        %v781 = vld [vmem:[#allocation2 + $0x2d8] sm:$0xff]
        %v782 = vld [vmem:[#allocation2 + $0x2e0] sm:$0xff]
        %v783 = vld [vmem:[#allocation2 + $0x2e8] sm:$0xff]
        %v784 = vld [vmem:[#allocation2 + $0x2f0] sm:$0xff]
        %v785 = vld [vmem:[#allocation2 + $0x2f8] sm:$0xff]
        %v786 = vld [vmem:[#allocation2 + $0x300] sm:$0xff]
        %v787 = vld [vmem:[#allocation2 + $0x308] sm:$0xff]
        %v788 = vld [vmem:[#allocation2 + $0x310] sm:$0xff]
        %v789 = vld [vmem:[#allocation2 + $0x318] sm:$0xff]
        %v790 = vld [vmem:[#allocation2 + $0x320] sm:$0xff]
        %v791 = vld [vmem:[#allocation2 + $0x328] sm:$0xff]
        %v792 = vld [vmem:[#allocation2 + $0x330] sm:$0xff]
        %v793 = vld [vmem:[#allocation2 + $0x338] sm:$0xff]
        %v794 = vld [vmem:[#allocation2 + $0x340] sm:$0xff]
        %v795 = vld [vmem:[#allocation2 + $0x348] sm:$0xff]
        %v796 = vld [vmem:[#allocation2 + $0x350] sm:$0xff]
        %v797 = vld [vmem:[#allocation2 + $0x358] sm:$0xff]
        %v798 = vld [vmem:[#allocation2 + $0x360] sm:$0xff]
        %v799 = vld [vmem:[#allocation2 + $0x368] sm:$0xff]
        %v800 = vld [vmem:[#allocation2 + $0x370] sm:$0xff]
        %v801 = vld [vmem:[#allocation2 + $0x378] sm:$0xff]
        %v802 = vld [vmem:[#allocation2 + $0x380] sm:$0xff]
        %v803 = vld [vmem:[#allocation2 + $0x388] sm:$0xff]
        %v804 = vld [vmem:[#allocation2 + $0x390] sm:$0xff]
        %v805 = vld [vmem:[#allocation2 + $0x398] sm:$0xff]
        %v806 = vld [vmem:[#allocation2 + $0x3a0] sm:$0xff]
        %v807 = vld [vmem:[#allocation2 + $0x3a8] sm:$0xff]
        %v808 = vld [vmem:[#allocation2 + $0x3b0] sm:$0xff]
        %v809 = vld [vmem:[#allocation2 + $0x3b8] sm:$0xff]
        %v810 = vld [vmem:[#allocation2 + $0x3c0] sm:$0xff]
        %v811 = vld [vmem:[#allocation2 + $0x3c8] sm:$0xff]
        %v812 = vld [vmem:[#allocation2 + $0x3d0] sm:$0xff]
        %v813 = vld [vmem:[#allocation2 + $0x3d8] sm:$0xff]
        %v814 = vld [vmem:[#allocation2 + $0x3e0] sm:$0xff]
        %v815 = vld [vmem:[#allocation2 + $0x3e8] sm:$0xff]
        %v816 = vld [vmem:[#allocation2 + $0x3f0] sm:$0xff]
        %v817 = vld [vmem:[#allocation2 + $0x3f8] sm:$0xff]
        %v818 = vld [vmem:[#allocation2 + $0x400] sm:$0xff]
        %v819 = vld [vmem:[#allocation2 + $0x408] sm:$0xff]
        %v820 = vld [vmem:[#allocation2 + $0x410] sm:$0xff]
        %v821 = vld [vmem:[#allocation2 + $0x418] sm:$0xff]
        %v822 = vld [vmem:[#allocation2 + $0x420] sm:$0xff]
        %v823 = vld [vmem:[#allocation2 + $0x428] sm:$0xff]
        %v824 = vld [vmem:[#allocation2 + $0x430] sm:$0xff]
        %v825 = vld [vmem:[#allocation2 + $0x438] sm:$0xff]
        %v826 = vld [vmem:[#allocation2 + $0x440] sm:$0xff]
        %v827 = vld [vmem:[#allocation2 + $0x448] sm:$0xff]
        %v828 = vld [vmem:[#allocation2 + $0x450] sm:$0xff]
        %v829 = vld [vmem:[#allocation2 + $0x458] sm:$0xff]
        %v830 = vld [vmem:[#allocation2 + $0x460] sm:$0xff]
        %v831 = vld [vmem:[#allocation2 + $0x468] sm:$0xff]
        %v832 = vld [vmem:[#allocation2 + $0x470] sm:$0xff]
        %v833 = vld [vmem:[#allocation2 + $0x478] sm:$0xff]
        %v834 = vld [vmem:[#allocation2 + $0x480] sm:$0xff]
        %v835 = vld [vmem:[#allocation2 + $0x488] sm:$0xff]
        %v836 = vld [vmem:[#allocation2 + $0x490] sm:$0xff]
        %v837 = vld [vmem:[#allocation2 + $0x498] sm:$0xff]
        %v838 = vld [vmem:[#allocation2 + $0x4a0] sm:$0xff]
        %v839 = vld [vmem:[#allocation2 + $0x4a8] sm:$0xff]
        %v840 = vld [vmem:[#allocation2 + $0x4b0] sm:$0xff]
        %v841 = vld [vmem:[#allocation2 + $0x4b8] sm:$0xff]
        %v842 = vld [vmem:[#allocation2 + $0x4c0] sm:$0xff]
        %v843 = vld [vmem:[#allocation2 + $0x4c8] sm:$0xff]
        %v844 = vld [vmem:[#allocation2 + $0x4d0] sm:$0xff]
        %v845 = vld [vmem:[#allocation2 + $0x4d8] sm:$0xff]
        %v846 = vld [vmem:[#allocation2 + $0x4e0] sm:$0xff]
        %v847 = vld [vmem:[#allocation2 + $0x4e8] sm:$0xff]
        %v848 = vld [vmem:[#allocation2 + $0x4f0] sm:$0xff]
        %v849 = vld [vmem:[#allocation2 + $0x4f8] sm:$0xff]
        %v850 = vld [vmem:[#allocation2 + $0x500] sm:$0xff]
        %v851 = vld [vmem:[#allocation2 + $0x508] sm:$0xff]
        %v852 = vld [vmem:[#allocation2 + $0x510] sm:$0xff]
        %v853 = vld [vmem:[#allocation2 + $0x518] sm:$0xff]
        %v854 = vld [vmem:[#allocation2 + $0x520] sm:$0xff]
        %v855 = vld [vmem:[#allocation2 + $0x528] sm:$0xff]
        %v856 = vld [vmem:[#allocation2 + $0x530] sm:$0xff]
        %v857 = vld [vmem:[#allocation2 + $0x538] sm:$0xff]
        %v858 = vld [vmem:[#allocation2 + $0x540] sm:$0xff]
        %v859 = vld [vmem:[#allocation2 + $0x548] sm:$0xff]
        %v860 = vld [vmem:[#allocation2 + $0x550] sm:$0xff]
        %v861 = vld [vmem:[#allocation2 + $0x558] sm:$0xff]
        %v862 = vld [vmem:[#allocation2 + $0x560] sm:$0xff]
        %v863 = vld [vmem:[#allocation2 + $0x568] sm:$0xff]
        %v864 = vld [vmem:[#allocation2 + $0x570] sm:$0xff]
        %v865 = vld [vmem:[#allocation2 + $0x578] sm:$0xff]
        %v866 = vld [vmem:[#allocation2 + $0x580] sm:$0xff]
        %v867 = vld [vmem:[#allocation2 + $0x588] sm:$0xff]
        %v868 = vld [vmem:[#allocation2 + $0x590] sm:$0xff]
        %v869 = vld [vmem:[#allocation2 + $0x598] sm:$0xff]
        %v870 = vld [vmem:[#allocation2 + $0x5a0] sm:$0xff]
        %v871 = vld [vmem:[#allocation2 + $0x5a8] sm:$0xff]
        %v872 = vld [vmem:[#allocation2 + $0x5b0] sm:$0xff]
        %v873 = vld [vmem:[#allocation2 + $0x5b8] sm:$0xff]
        %v874 = vld [vmem:[#allocation2 + $0x5c0] sm:$0xff]
        %v875 = vld [vmem:[#allocation2 + $0x5c8] sm:$0xff]
        %v876 = vld [vmem:[#allocation2 + $0x5d0] sm:$0xff]
        %v877 = vld [vmem:[#allocation2 + $0x5d8] sm:$0xff]
        %v878 = vld [vmem:[#allocation2 + $0x5e0] sm:$0xff]
        %v879 = vld [vmem:[#allocation2 + $0x5e8] sm:$0xff]
        %v880 = vld [vmem:[#allocation2 + $0x5f0] sm:$0xff]
        %v881 = vld [vmem:[#allocation2 + $0x5f8] sm:$0xff]
        %v882 = vld [vmem:[#allocation2 + $0x600] sm:$0xff]
        %v883 = vld [vmem:[#allocation2 + $0x608] sm:$0xff]
        %v884 = vld [vmem:[#allocation2 + $0x610] sm:$0xff]
        %v885 = vld [vmem:[#allocation2 + $0x618] sm:$0xff]
        %v886 = vld [vmem:[#allocation2 + $0x620] sm:$0xff]
        %v887 = vld [vmem:[#allocation2 + $0x628] sm:$0xff]
        %v888 = vld [vmem:[#allocation2 + $0x630] sm:$0xff]
        %v889 = vld [vmem:[#allocation2 + $0x638] sm:$0xff]
        %v890 = vld [vmem:[#allocation2 + $0x640] sm:$0xff]
        %v891 = vld [vmem:[#allocation2 + $0x648] sm:$0xff]
        %v892 = vld [vmem:[#allocation2 + $0x650] sm:$0xff]
        %v893 = vld [vmem:[#allocation2 + $0x658] sm:$0xff]
        %v894 = vld [vmem:[#allocation2 + $0x660] sm:$0xff]
        %v895 = vld [vmem:[#allocation2 + $0x668] sm:$0xff]
        %v896 = vld [vmem:[#allocation2 + $0x670] sm:$0xff]
        %v897 = vld [vmem:[#allocation2 + $0x678] sm:$0xff]
        %v898 = vld [vmem:[#allocation2 + $0x680] sm:$0xff]
        %v899 = vld [vmem:[#allocation2 + $0x688] sm:$0xff]
        %v900 = vld [vmem:[#allocation2 + $0x690] sm:$0xff]
        %v901 = vld [vmem:[#allocation2 + $0x698] sm:$0xff]
        %v902 = vld [vmem:[#allocation2 + $0x6a0] sm:$0xff]
        %v903 = vld [vmem:[#allocation2 + $0x6a8] sm:$0xff]
        %v904 = vld [vmem:[#allocation2 + $0x6b0] sm:$0xff]
        %v905 = vld [vmem:[#allocation2 + $0x6b8] sm:$0xff]
        %v906 = vld [vmem:[#allocation2 + $0x6c0] sm:$0xff]
        %v907 = vld [vmem:[#allocation2 + $0x6c8] sm:$0xff]
        %v908 = vld [vmem:[#allocation2 + $0x6d0] sm:$0xff]
        %v909 = vld [vmem:[#allocation2 + $0x6d8] sm:$0xff]
        %v910 = vld [vmem:[#allocation2 + $0x6e0] sm:$0xff]
        %v911 = vld [vmem:[#allocation2 + $0x6e8] sm:$0xff]
        %v912 = vld [vmem:[#allocation2 + $0x6f0] sm:$0xff]
        %v913 = vld [vmem:[#allocation2 + $0x6f8] sm:$0xff]
        %v914 = vld [vmem:[#allocation2 + $0x700] sm:$0xff]
        %v915 = vld [vmem:[#allocation2 + $0x708] sm:$0xff]
        %v916 = vld [vmem:[#allocation2 + $0x710] sm:$0xff]
        %v917 = vld [vmem:[#allocation2 + $0x718] sm:$0xff]
        %v918 = vld [vmem:[#allocation2 + $0x720] sm:$0xff]
        %v919 = vld [vmem:[#allocation2 + $0x728] sm:$0xff]
        %v920 = vld [vmem:[#allocation2 + $0x730] sm:$0xff]
        %v921 = vld [vmem:[#allocation2 + $0x738] sm:$0xff]
        %v922 = vld [vmem:[#allocation2 + $0x740] sm:$0xff]
        %v923 = vld [vmem:[#allocation2 + $0x748] sm:$0xff]
        %v924 = vld [vmem:[#allocation2 + $0x750] sm:$0xff]
        %v925 = vld [vmem:[#allocation2 + $0x758] sm:$0xff]
        %v926 = vld [vmem:[#allocation2 + $0x760] sm:$0xff]
        %v927 = vld [vmem:[#allocation2 + $0x768] sm:$0xff]
        %v928 = vld [vmem:[#allocation2 + $0x770] sm:$0xff]
        %v929 = vld [vmem:[#allocation2 + $0x778] sm:$0xff]
        %v930 = vld [vmem:[#allocation2 + $0x780] sm:$0xff]
        %v931 = vld [vmem:[#allocation2 + $0x788] sm:$0xff]
        %v932 = vld [vmem:[#allocation2 + $0x790] sm:$0xff]
        %v933 = vld [vmem:[#allocation2 + $0x798] sm:$0xff]
        %v934 = vld [vmem:[#allocation2 + $0x7a0] sm:$0xff]
        %v935 = vld [vmem:[#allocation2 + $0x7a8] sm:$0xff]
        %v936 = vld [vmem:[#allocation2 + $0x7b0] sm:$0xff]
        %v937 = vld [vmem:[#allocation2 + $0x7b8] sm:$0xff]
        %v938 = vld [vmem:[#allocation2 + $0x7c0] sm:$0xff]
        %v939 = vld [vmem:[#allocation2 + $0x7c8] sm:$0xff]
        %v940 = vld [vmem:[#allocation2 + $0x7d0] sm:$0xff]
        %v941 = vld [vmem:[#allocation2 + $0x7d8] sm:$0xff]
        %v942 = vld [vmem:[#allocation2 + $0x7e0] sm:$0xff]
        %v943 = vld [vmem:[#allocation2 + $0x7e8] sm:$0xff]
        %v944 = vld [vmem:[#allocation2 + $0x7f0] sm:$0xff]
        %v945 = vld [vmem:[#allocation2 + $0x7f8] sm:$0xff]
        %v946 = vld [vmem:[%s4] sm:$0xf]
        %v948 = vlaneseq
        %v949 = vshrl.u32 %v948, 7
        %v950 = vsub.s32 0, %v949
        %v951 = vrot.slane %v946, %v950
        %v952 = vlaneseq
        %v953 = vshrl.u32 %v952, 7
        %v954 = vsub.s32 1, %v953
        %v955 = vrot.slane %v946, %v954
        %v956 = vlaneseq
        %v957 = vshrl.u32 %v956, 7
        %v958 = vsub.s32 2, %v957
        %v959 = vrot.slane %v946, %v958
        %v960 = vlaneseq
        %v961 = vshrl.u32 %v960, 7
        %v962 = vsub.s32 3, %v961
        %v963 = vrot.slane %v946, %v962
        %v1224 = vunpack.c.l.b16 %v690
        %v1225 = vunpack.c.h.b16 %v690
        %v1226 = vunpack.c.l.b16 %v691
        %v1227 = vunpack.c.h.b16 %v691
        %v1228 = vunpack.c.l.b16 %v692
        %v1229 = vunpack.c.h.b16 %v692
        %v1230 = vunpack.c.l.b16 %v693
        %v1231 = vunpack.c.h.b16 %v693
        %v1232 = vunpack.c.l.b16 %v694
        %v1233 = vunpack.c.h.b16 %v694
        %v1234 = vunpack.c.l.b16 %v695
        %v1235 = vunpack.c.h.b16 %v695
        %v1236 = vunpack.c.l.b16 %v696
        %v1237 = vunpack.c.h.b16 %v696
        %v1238 = vunpack.c.l.b16 %v697
        %v1239 = vunpack.c.h.b16 %v697
        %v1240 = vunpack.c.l.b16 %v698
        %v1241 = vunpack.c.h.b16 %v698
        %v1242 = vunpack.c.l.b16 %v699
        %v1243 = vunpack.c.h.b16 %v699
        %v1244 = vunpack.c.l.b16 %v700
        %v1245 = vunpack.c.h.b16 %v700
        %v1246 = vunpack.c.l.b16 %v701
        %v1247 = vunpack.c.h.b16 %v701
        %v1248 = vunpack.c.l.b16 %v702
        %v1249 = vunpack.c.h.b16 %v702
        %v1250 = vunpack.c.l.b16 %v703
        %v1251 = vunpack.c.h.b16 %v703
        %v1252 = vunpack.c.l.b16 %v704
        %v1253 = vunpack.c.h.b16 %v704
        %v1254 = vunpack.c.l.b16 %v705
        %v1255 = vunpack.c.h.b16 %v705
        %v1256 = vunpack.c.l.b16 %v706
        %v1257 = vunpack.c.h.b16 %v706
        %v1258 = vunpack.c.l.b16 %v707
        %v1259 = vunpack.c.h.b16 %v707
        %v1260 = vunpack.c.l.b16 %v708
        %v1261 = vunpack.c.h.b16 %v708
        %v1262 = vunpack.c.l.b16 %v709
        %v1263 = vunpack.c.h.b16 %v709
        %v1264 = vunpack.c.l.b16 %v710
        %v1265 = vunpack.c.h.b16 %v710
        %v1266 = vunpack.c.l.b16 %v711
        %v1267 = vunpack.c.h.b16 %v711
        %v1268 = vunpack.c.l.b16 %v712
        %v1269 = vunpack.c.h.b16 %v712
        %v1270 = vunpack.c.l.b16 %v713
        %v1271 = vunpack.c.h.b16 %v713
        %v1272 = vunpack.c.l.b16 %v714
        %v1273 = vunpack.c.h.b16 %v714
        %v1274 = vunpack.c.l.b16 %v715
        %v1275 = vunpack.c.h.b16 %v715
        %v1276 = vunpack.c.l.b16 %v716
        %v1277 = vunpack.c.h.b16 %v716
        %v1278 = vunpack.c.l.b16 %v717
        %v1279 = vunpack.c.h.b16 %v717
        %v1280 = vunpack.c.l.b16 %v718
        %v1281 = vunpack.c.h.b16 %v718
        %v1282 = vunpack.c.l.b16 %v719
        %v1283 = vunpack.c.h.b16 %v719
        %v1284 = vunpack.c.l.b16 %v720
        %v1285 = vunpack.c.h.b16 %v720
        %v1286 = vunpack.c.l.b16 %v721
        %v1287 = vunpack.c.h.b16 %v721
        %v1288 = vunpack.c.l.b16 %v722
        %v1289 = vunpack.c.h.b16 %v722
        %v1290 = vunpack.c.l.b16 %v723
        %v1291 = vunpack.c.h.b16 %v723
        %v1292 = vunpack.c.l.b16 %v724
        %v1293 = vunpack.c.h.b16 %v724
        %v1294 = vunpack.c.l.b16 %v725
        %v1295 = vunpack.c.h.b16 %v725
        %v1296 = vunpack.c.l.b16 %v726
        %v1297 = vunpack.c.h.b16 %v726
        %v1298 = vunpack.c.l.b16 %v727
        %v1299 = vunpack.c.h.b16 %v727
        %v1300 = vunpack.c.l.b16 %v728
        %v1301 = vunpack.c.h.b16 %v728
        %v1302 = vunpack.c.l.b16 %v729
        %v1303 = vunpack.c.h.b16 %v729
        %v1304 = vunpack.c.l.b16 %v730
        %v1305 = vunpack.c.h.b16 %v730
        %v1306 = vunpack.c.l.b16 %v731
        %v1307 = vunpack.c.h.b16 %v731
        %v1308 = vunpack.c.l.b16 %v732
        %v1309 = vunpack.c.h.b16 %v732
        %v1310 = vunpack.c.l.b16 %v733
        %v1311 = vunpack.c.h.b16 %v733
        %v1312 = vunpack.c.l.b16 %v734
        %v1313 = vunpack.c.h.b16 %v734
        %v1314 = vunpack.c.l.b16 %v735
        %v1315 = vunpack.c.h.b16 %v735
        %v1316 = vunpack.c.l.b16 %v736
        %v1317 = vunpack.c.h.b16 %v736
        %v1318 = vunpack.c.l.b16 %v737
        %v1319 = vunpack.c.h.b16 %v737
        %v1320 = vunpack.c.l.b16 %v738
        %v1321 = vunpack.c.h.b16 %v738
        %v1322 = vunpack.c.l.b16 %v739
        %v1323 = vunpack.c.h.b16 %v739
        %v1324 = vunpack.c.l.b16 %v740
        %v1325 = vunpack.c.h.b16 %v740
        %v1326 = vunpack.c.l.b16 %v741
        %v1327 = vunpack.c.h.b16 %v741
        %v1328 = vunpack.c.l.b16 %v742
        %v1329 = vunpack.c.h.b16 %v742
        %v1330 = vunpack.c.l.b16 %v743
        %v1331 = vunpack.c.h.b16 %v743
        %v1332 = vunpack.c.l.b16 %v744
        %v1333 = vunpack.c.h.b16 %v744
        %v1334 = vunpack.c.l.b16 %v745
        %v1335 = vunpack.c.h.b16 %v745
        %v1336 = vunpack.c.l.b16 %v746
        %v1337 = vunpack.c.h.b16 %v746
        %v1338 = vunpack.c.l.b16 %v747
        %v1339 = vunpack.c.h.b16 %v747
        %v1340 = vunpack.c.l.b16 %v748
        %v1341 = vunpack.c.h.b16 %v748
        %v1342 = vunpack.c.l.b16 %v749
        %v1343 = vunpack.c.h.b16 %v749
        %v1344 = vunpack.c.l.b16 %v750
        %v1345 = vunpack.c.h.b16 %v750
        %v1346 = vunpack.c.l.b16 %v751
        %v1347 = vunpack.c.h.b16 %v751
        %v1348 = vunpack.c.l.b16 %v752
        %v1349 = vunpack.c.h.b16 %v752
        %v1350 = vunpack.c.l.b16 %v753
        %v1351 = vunpack.c.h.b16 %v753
        %v1352 = vunpack.c.l.b16 %v754
        %v1353 = vunpack.c.h.b16 %v754
        %v1354 = vunpack.c.l.b16 %v755
        %v1355 = vunpack.c.h.b16 %v755
        %v1356 = vunpack.c.l.b16 %v756
        %v1357 = vunpack.c.h.b16 %v756
        %v1358 = vunpack.c.l.b16 %v757
        %v1359 = vunpack.c.h.b16 %v757
        %v1360 = vunpack.c.l.b16 %v758
        %v1361 = vunpack.c.h.b16 %v758
        %v1362 = vunpack.c.l.b16 %v759
        %v1363 = vunpack.c.h.b16 %v759
        %v1364 = vunpack.c.l.b16 %v760
        %v1365 = vunpack.c.h.b16 %v760
        %v1366 = vunpack.c.l.b16 %v761
        %v1367 = vunpack.c.h.b16 %v761
        %v1368 = vunpack.c.l.b16 %v762
        %v1369 = vunpack.c.h.b16 %v762
        %v1370 = vunpack.c.l.b16 %v763
        %v1371 = vunpack.c.h.b16 %v763
        %v1372 = vunpack.c.l.b16 %v764
        %v1373 = vunpack.c.h.b16 %v764
        %v1374 = vunpack.c.l.b16 %v765
        %v1375 = vunpack.c.h.b16 %v765
        %v1376 = vunpack.c.l.b16 %v766
        %v1377 = vunpack.c.h.b16 %v766
        %v1378 = vunpack.c.l.b16 %v767
        %v1379 = vunpack.c.h.b16 %v767
        %v1380 = vunpack.c.l.b16 %v768
        %v1381 = vunpack.c.h.b16 %v768
        %v1382 = vunpack.c.l.b16 %v769
        %v1383 = vunpack.c.h.b16 %v769
        %v1384 = vunpack.c.l.b16 %v770
        %v1385 = vunpack.c.h.b16 %v770
        %v1386 = vunpack.c.l.b16 %v771
        %v1387 = vunpack.c.h.b16 %v771
        %v1388 = vunpack.c.l.b16 %v772
        %v1389 = vunpack.c.h.b16 %v772
        %v1390 = vunpack.c.l.b16 %v773
        %v1391 = vunpack.c.h.b16 %v773
        %v1392 = vunpack.c.l.b16 %v774
        %v1393 = vunpack.c.h.b16 %v774
        %v1394 = vunpack.c.l.b16 %v775
        %v1395 = vunpack.c.h.b16 %v775
        %v1396 = vunpack.c.l.b16 %v776
        %v1397 = vunpack.c.h.b16 %v776
        %v1398 = vunpack.c.l.b16 %v777
        %v1399 = vunpack.c.h.b16 %v777
        %v1400 = vunpack.c.l.b16 %v778
        %v1401 = vunpack.c.h.b16 %v778
        %v1402 = vunpack.c.l.b16 %v779
        %v1403 = vunpack.c.h.b16 %v779
        %v1404 = vunpack.c.l.b16 %v780
        %v1405 = vunpack.c.h.b16 %v780
        %v1406 = vunpack.c.l.b16 %v781
        %v1407 = vunpack.c.h.b16 %v781
        %v1408 = vunpack.c.l.b16 %v782
        %v1409 = vunpack.c.h.b16 %v782
        %v1410 = vunpack.c.l.b16 %v783
        %v1411 = vunpack.c.h.b16 %v783
        %v1412 = vunpack.c.l.b16 %v784
        %v1413 = vunpack.c.h.b16 %v784
        %v1414 = vunpack.c.l.b16 %v785
        %v1415 = vunpack.c.h.b16 %v785
        %v1416 = vunpack.c.l.b16 %v786
        %v1417 = vunpack.c.h.b16 %v786
        %v1418 = vunpack.c.l.b16 %v787
        %v1419 = vunpack.c.h.b16 %v787
        %v1420 = vunpack.c.l.b16 %v788
        %v1421 = vunpack.c.h.b16 %v788
        %v1422 = vunpack.c.l.b16 %v789
        %v1423 = vunpack.c.h.b16 %v789
        %v1424 = vunpack.c.l.b16 %v790
        %v1425 = vunpack.c.h.b16 %v790
        %v1426 = vunpack.c.l.b16 %v791
        %v1427 = vunpack.c.h.b16 %v791
        %v1428 = vunpack.c.l.b16 %v792
        %v1429 = vunpack.c.h.b16 %v792
        %v1430 = vunpack.c.l.b16 %v793
        %v1431 = vunpack.c.h.b16 %v793
        %v1432 = vunpack.c.l.b16 %v794
        %v1433 = vunpack.c.h.b16 %v794
        %v1434 = vunpack.c.l.b16 %v795
        %v1435 = vunpack.c.h.b16 %v795
        %v1436 = vunpack.c.l.b16 %v796
        %v1437 = vunpack.c.h.b16 %v796
        %v1438 = vunpack.c.l.b16 %v797
        %v1439 = vunpack.c.h.b16 %v797
        %v1440 = vunpack.c.l.b16 %v798
        %v1441 = vunpack.c.h.b16 %v798
        %v1442 = vunpack.c.l.b16 %v799
        %v1443 = vunpack.c.h.b16 %v799
        %v1444 = vunpack.c.l.b16 %v800
        %v1445 = vunpack.c.h.b16 %v800
        %v1446 = vunpack.c.l.b16 %v801
        %v1447 = vunpack.c.h.b16 %v801
        %v1448 = vunpack.c.l.b16 %v802
        %v1449 = vunpack.c.h.b16 %v802
        %v1450 = vunpack.c.l.b16 %v803
        %v1451 = vunpack.c.h.b16 %v803
        %v1452 = vunpack.c.l.b16 %v804
        %v1453 = vunpack.c.h.b16 %v804
        %v1454 = vunpack.c.l.b16 %v805
        %v1455 = vunpack.c.h.b16 %v805
        %v1456 = vunpack.c.l.b16 %v806
        %v1457 = vunpack.c.h.b16 %v806
        %v1458 = vunpack.c.l.b16 %v807
        %v1459 = vunpack.c.h.b16 %v807
        %v1460 = vunpack.c.l.b16 %v808
        %v1461 = vunpack.c.h.b16 %v808
        %v1462 = vunpack.c.l.b16 %v809
        %v1463 = vunpack.c.h.b16 %v809
        %v1464 = vunpack.c.l.b16 %v810
        %v1465 = vunpack.c.h.b16 %v810
        %v1466 = vunpack.c.l.b16 %v811
        %v1467 = vunpack.c.h.b16 %v811
        %v1468 = vunpack.c.l.b16 %v812
        %v1469 = vunpack.c.h.b16 %v812
        %v1470 = vunpack.c.l.b16 %v813
        %v1471 = vunpack.c.h.b16 %v813
        %v1472 = vunpack.c.l.b16 %v814
        %v1473 = vunpack.c.h.b16 %v814
        %v1474 = vunpack.c.l.b16 %v815
        %v1475 = vunpack.c.h.b16 %v815
        %v1476 = vunpack.c.l.b16 %v816
        %v1477 = vunpack.c.h.b16 %v816
        %v1478 = vunpack.c.l.b16 %v817
        %v1479 = vunpack.c.h.b16 %v817
        %v1480 = vunpack.c.l.b16 %v818
        %v1481 = vunpack.c.h.b16 %v818
        %v1482 = vunpack.c.l.b16 %v819
        %v1483 = vunpack.c.h.b16 %v819
        %v1484 = vunpack.c.l.b16 %v820
        %v1485 = vunpack.c.h.b16 %v820
        %v1486 = vunpack.c.l.b16 %v821
        %v1487 = vunpack.c.h.b16 %v821
        %v1488 = vunpack.c.l.b16 %v822
        %v1489 = vunpack.c.h.b16 %v822
        %v1490 = vunpack.c.l.b16 %v823
        %v1491 = vunpack.c.h.b16 %v823
        %v1492 = vunpack.c.l.b16 %v824
        %v1493 = vunpack.c.h.b16 %v824
        %v1494 = vunpack.c.l.b16 %v825
        %v1495 = vunpack.c.h.b16 %v825
        %v1496 = vunpack.c.l.b16 %v826
        %v1497 = vunpack.c.h.b16 %v826
        %v1498 = vunpack.c.l.b16 %v827
        %v1499 = vunpack.c.h.b16 %v827
        %v1500 = vunpack.c.l.b16 %v828
        %v1501 = vunpack.c.h.b16 %v828
        %v1502 = vunpack.c.l.b16 %v829
        %v1503 = vunpack.c.h.b16 %v829
        %v1504 = vunpack.c.l.b16 %v830
        %v1505 = vunpack.c.h.b16 %v830
        %v1506 = vunpack.c.l.b16 %v831
        %v1507 = vunpack.c.h.b16 %v831
        %v1508 = vunpack.c.l.b16 %v832
        %v1509 = vunpack.c.h.b16 %v832
        %v1510 = vunpack.c.l.b16 %v833
        %v1511 = vunpack.c.h.b16 %v833
        %v1512 = vunpack.c.l.b16 %v834
        %v1513 = vunpack.c.h.b16 %v834
        %v1514 = vunpack.c.l.b16 %v835
        %v1515 = vunpack.c.h.b16 %v835
        %v1516 = vunpack.c.l.b16 %v836
        %v1517 = vunpack.c.h.b16 %v836
        %v1518 = vunpack.c.l.b16 %v837
        %v1519 = vunpack.c.h.b16 %v837
        %v1520 = vunpack.c.l.b16 %v838
        %v1521 = vunpack.c.h.b16 %v838
        %v1522 = vunpack.c.l.b16 %v839
        %v1523 = vunpack.c.h.b16 %v839
        %v1524 = vunpack.c.l.b16 %v840
        %v1525 = vunpack.c.h.b16 %v840
        %v1526 = vunpack.c.l.b16 %v841
        %v1527 = vunpack.c.h.b16 %v841
        %v1528 = vunpack.c.l.b16 %v842
        %v1529 = vunpack.c.h.b16 %v842
        %v1530 = vunpack.c.l.b16 %v843
        %v1531 = vunpack.c.h.b16 %v843
        %v1532 = vunpack.c.l.b16 %v844
        %v1533 = vunpack.c.h.b16 %v844
        %v1534 = vunpack.c.l.b16 %v845
        %v1535 = vunpack.c.h.b16 %v845
        %v1536 = vunpack.c.l.b16 %v846
        %v1537 = vunpack.c.h.b16 %v846
        %v1538 = vunpack.c.l.b16 %v847
        %v1539 = vunpack.c.h.b16 %v847
        %v1540 = vunpack.c.l.b16 %v848
        %v1541 = vunpack.c.h.b16 %v848
        %v1542 = vunpack.c.l.b16 %v849
        %v1543 = vunpack.c.h.b16 %v849
        %v1544 = vunpack.c.l.b16 %v850
        %v1545 = vunpack.c.h.b16 %v850
        %v1546 = vunpack.c.l.b16 %v851
        %v1547 = vunpack.c.h.b16 %v851
        %v1548 = vunpack.c.l.b16 %v852
        %v1549 = vunpack.c.h.b16 %v852
        %v1550 = vunpack.c.l.b16 %v853
        %v1551 = vunpack.c.h.b16 %v853
        %v1552 = vunpack.c.l.b16 %v854
        %v1553 = vunpack.c.h.b16 %v854
        %v1554 = vunpack.c.l.b16 %v855
        %v1555 = vunpack.c.h.b16 %v855
        %v1556 = vunpack.c.l.b16 %v856
        %v1557 = vunpack.c.h.b16 %v856
        %v1558 = vunpack.c.l.b16 %v857
        %v1559 = vunpack.c.h.b16 %v857
        %v1560 = vunpack.c.l.b16 %v858
        %v1561 = vunpack.c.h.b16 %v858
        %v1562 = vunpack.c.l.b16 %v859
        %v1563 = vunpack.c.h.b16 %v859
        %v1564 = vunpack.c.l.b16 %v860
        %v1565 = vunpack.c.h.b16 %v860
        %v1566 = vunpack.c.l.b16 %v861
        %v1567 = vunpack.c.h.b16 %v861
        %v1568 = vunpack.c.l.b16 %v862
        %v1569 = vunpack.c.h.b16 %v862
        %v1570 = vunpack.c.l.b16 %v863
        %v1571 = vunpack.c.h.b16 %v863
        %v1572 = vunpack.c.l.b16 %v864
        %v1573 = vunpack.c.h.b16 %v864
        %v1574 = vunpack.c.l.b16 %v865
        %v1575 = vunpack.c.h.b16 %v865
        %v1576 = vunpack.c.l.b16 %v866
        %v1577 = vunpack.c.h.b16 %v866
        %v1578 = vunpack.c.l.b16 %v867
        %v1579 = vunpack.c.h.b16 %v867
        %v1580 = vunpack.c.l.b16 %v868
        %v1581 = vunpack.c.h.b16 %v868
        %v1582 = vunpack.c.l.b16 %v869
        %v1583 = vunpack.c.h.b16 %v869
        %v1584 = vunpack.c.l.b16 %v870
        %v1585 = vunpack.c.h.b16 %v870
        %v1586 = vunpack.c.l.b16 %v871
        %v1587 = vunpack.c.h.b16 %v871
        %v1588 = vunpack.c.l.b16 %v872
        %v1589 = vunpack.c.h.b16 %v872
        %v1590 = vunpack.c.l.b16 %v873
        %v1591 = vunpack.c.h.b16 %v873
        %v1592 = vunpack.c.l.b16 %v874
        %v1593 = vunpack.c.h.b16 %v874
        %v1594 = vunpack.c.l.b16 %v875
        %v1595 = vunpack.c.h.b16 %v875
        %v1596 = vunpack.c.l.b16 %v876
        %v1597 = vunpack.c.h.b16 %v876
        %v1598 = vunpack.c.l.b16 %v877
        %v1599 = vunpack.c.h.b16 %v877
        %v1600 = vunpack.c.l.b16 %v878
        %v1601 = vunpack.c.h.b16 %v878
        %v1602 = vunpack.c.l.b16 %v879
        %v1603 = vunpack.c.h.b16 %v879
        %v1604 = vunpack.c.l.b16 %v880
        %v1605 = vunpack.c.h.b16 %v880
        %v1606 = vunpack.c.l.b16 %v881
        %v1607 = vunpack.c.h.b16 %v881
        %v1608 = vunpack.c.l.b16 %v882
        %v1609 = vunpack.c.h.b16 %v882
        %v1610 = vunpack.c.l.b16 %v883
        %v1611 = vunpack.c.h.b16 %v883
        %v1612 = vunpack.c.l.b16 %v884
        %v1613 = vunpack.c.h.b16 %v884
        %v1614 = vunpack.c.l.b16 %v885
        %v1615 = vunpack.c.h.b16 %v885
        %v1616 = vunpack.c.l.b16 %v886
        %v1617 = vunpack.c.h.b16 %v886
        %v1618 = vunpack.c.l.b16 %v887
        %v1619 = vunpack.c.h.b16 %v887
        %v1620 = vunpack.c.l.b16 %v888
        %v1621 = vunpack.c.h.b16 %v888
        %v1622 = vunpack.c.l.b16 %v889
        %v1623 = vunpack.c.h.b16 %v889
        %v1624 = vunpack.c.l.b16 %v890
        %v1625 = vunpack.c.h.b16 %v890
        %v1626 = vunpack.c.l.b16 %v891
        %v1627 = vunpack.c.h.b16 %v891
        %v1628 = vunpack.c.l.b16 %v892
        %v1629 = vunpack.c.h.b16 %v892
        %v1630 = vunpack.c.l.b16 %v893
        %v1631 = vunpack.c.h.b16 %v893
        %v1632 = vunpack.c.l.b16 %v894
        %v1633 = vunpack.c.h.b16 %v894
        %v1634 = vunpack.c.l.b16 %v895
        %v1635 = vunpack.c.h.b16 %v895
        %v1636 = vunpack.c.l.b16 %v896
        %v1637 = vunpack.c.h.b16 %v896
        %v1638 = vunpack.c.l.b16 %v897
        %v1639 = vunpack.c.h.b16 %v897
        %v1640 = vunpack.c.l.b16 %v898
        %v1641 = vunpack.c.h.b16 %v898
        %v1642 = vunpack.c.l.b16 %v899
        %v1643 = vunpack.c.h.b16 %v899
        %v1644 = vunpack.c.l.b16 %v900
        %v1645 = vunpack.c.h.b16 %v900
        %v1646 = vunpack.c.l.b16 %v901
        %v1647 = vunpack.c.h.b16 %v901
        %v1648 = vunpack.c.l.b16 %v902
        %v1649 = vunpack.c.h.b16 %v902
        %v1650 = vunpack.c.l.b16 %v903
        %v1651 = vunpack.c.h.b16 %v903
        %v1652 = vunpack.c.l.b16 %v904
        %v1653 = vunpack.c.h.b16 %v904
        %v1654 = vunpack.c.l.b16 %v905
        %v1655 = vunpack.c.h.b16 %v905
        %v1656 = vunpack.c.l.b16 %v906
        %v1657 = vunpack.c.h.b16 %v906
        %v1658 = vunpack.c.l.b16 %v907
        %v1659 = vunpack.c.h.b16 %v907
        %v1660 = vunpack.c.l.b16 %v908
        %v1661 = vunpack.c.h.b16 %v908
        %v1662 = vunpack.c.l.b16 %v909
        %v1663 = vunpack.c.h.b16 %v909
        %v1664 = vunpack.c.l.b16 %v910
        %v1665 = vunpack.c.h.b16 %v910
        %v1666 = vunpack.c.l.b16 %v911
        %v1667 = vunpack.c.h.b16 %v911
        %v1668 = vunpack.c.l.b16 %v912
        %v1669 = vunpack.c.h.b16 %v912
        %v1670 = vunpack.c.l.b16 %v913
        %v1671 = vunpack.c.h.b16 %v913
        %v1672 = vunpack.c.l.b16 %v914
        %v1673 = vunpack.c.h.b16 %v914
        %v1674 = vunpack.c.l.b16 %v915
        %v1675 = vunpack.c.h.b16 %v915
        %v1676 = vunpack.c.l.b16 %v916
        %v1677 = vunpack.c.h.b16 %v916
        %v1678 = vunpack.c.l.b16 %v917
        %v1679 = vunpack.c.h.b16 %v917
        %v1680 = vunpack.c.l.b16 %v918
        %v1681 = vunpack.c.h.b16 %v918
        %v1682 = vunpack.c.l.b16 %v919
        %v1683 = vunpack.c.h.b16 %v919
        %v1684 = vunpack.c.l.b16 %v920
        %v1685 = vunpack.c.h.b16 %v920
        %v1686 = vunpack.c.l.b16 %v921
        %v1687 = vunpack.c.h.b16 %v921
        %v1688 = vunpack.c.l.b16 %v922
        %v1689 = vunpack.c.h.b16 %v922
        %v1690 = vunpack.c.l.b16 %v923
        %v1691 = vunpack.c.h.b16 %v923
        %v1692 = vunpack.c.l.b16 %v924
        %v1693 = vunpack.c.h.b16 %v924
        %v1694 = vunpack.c.l.b16 %v925
        %v1695 = vunpack.c.h.b16 %v925
        %v1696 = vunpack.c.l.b16 %v926
        %v1697 = vunpack.c.h.b16 %v926
        %v1698 = vunpack.c.l.b16 %v927
        %v1699 = vunpack.c.h.b16 %v927
        %v1700 = vunpack.c.l.b16 %v928
        %v1701 = vunpack.c.h.b16 %v928
        %v1702 = vunpack.c.l.b16 %v929
        %v1703 = vunpack.c.h.b16 %v929
        %v1704 = vunpack.c.l.b16 %v930
        %v1705 = vunpack.c.h.b16 %v930
        %v1706 = vunpack.c.l.b16 %v931
        %v1707 = vunpack.c.h.b16 %v931
        %v1708 = vunpack.c.l.b16 %v932
        %v1709 = vunpack.c.h.b16 %v932
        %v1710 = vunpack.c.l.b16 %v933
        %v1711 = vunpack.c.h.b16 %v933
        %v1712 = vunpack.c.l.b16 %v934
        %v1713 = vunpack.c.h.b16 %v934
        %v1714 = vunpack.c.l.b16 %v935
        %v1715 = vunpack.c.h.b16 %v935
        %v1716 = vunpack.c.l.b16 %v936
        %v1717 = vunpack.c.h.b16 %v936
        %v1718 = vunpack.c.l.b16 %v937
        %v1719 = vunpack.c.h.b16 %v937
        %v1720 = vunpack.c.l.b16 %v938
        %v1721 = vunpack.c.h.b16 %v938
        %v1722 = vunpack.c.l.b16 %v939
        %v1723 = vunpack.c.h.b16 %v939
        %v1724 = vunpack.c.l.b16 %v940
        %v1725 = vunpack.c.h.b16 %v940
        %v1726 = vunpack.c.l.b16 %v941
        %v1727 = vunpack.c.h.b16 %v941
        %v1728 = vunpack.c.l.b16 %v942
        %v1729 = vunpack.c.h.b16 %v942
        %v1730 = vunpack.c.l.b16 %v943
        %v1731 = vunpack.c.h.b16 %v943
        %v1732 = vunpack.c.l.b16 %v944
        %v1733 = vunpack.c.h.b16 %v944
        %v1734 = vunpack.c.l.b16 %v945
        %v1735 = vunpack.c.h.b16 %v945
        %v1736 = vpack.c.b16 %v1228, %v1224
        %v1737 = vpack.c.b16 %v1229, %v1225
        %v1738 = vpack.c.b16 %v1230, %v1226
        %v1739 = vpack.c.b16 %v1231, %v1227
        %v1740 = vpack.c.b16 %v1236, %v1232
        %v1741 = vpack.c.b16 %v1237, %v1233
        %v1742 = vpack.c.b16 %v1238, %v1234
        %v1743 = vpack.c.b16 %v1239, %v1235
        %v1744 = vpack.c.b16 %v1244, %v1240
        %v1745 = vpack.c.b16 %v1245, %v1241
        %v1746 = vpack.c.b16 %v1246, %v1242
        %v1747 = vpack.c.b16 %v1247, %v1243
        %v1748 = vpack.c.b16 %v1252, %v1248
        %v1749 = vpack.c.b16 %v1253, %v1249
        %v1750 = vpack.c.b16 %v1254, %v1250
        %v1751 = vpack.c.b16 %v1255, %v1251
        %v1752 = vpack.c.b16 %v1260, %v1256
        %v1753 = vpack.c.b16 %v1261, %v1257
        %v1754 = vpack.c.b16 %v1262, %v1258
        %v1755 = vpack.c.b16 %v1263, %v1259
        %v1756 = vpack.c.b16 %v1268, %v1264
        %v1757 = vpack.c.b16 %v1269, %v1265
        %v1758 = vpack.c.b16 %v1270, %v1266
        %v1759 = vpack.c.b16 %v1271, %v1267
        %v1760 = vpack.c.b16 %v1276, %v1272
        %v1761 = vpack.c.b16 %v1277, %v1273
        %v1762 = vpack.c.b16 %v1278, %v1274
        %v1763 = vpack.c.b16 %v1279, %v1275
        %v1764 = vpack.c.b16 %v1284, %v1280
        %v1765 = vpack.c.b16 %v1285, %v1281
        %v1766 = vpack.c.b16 %v1286, %v1282
        %v1767 = vpack.c.b16 %v1287, %v1283
        %v1768 = vpack.c.b16 %v1292, %v1288
        %v1769 = vpack.c.b16 %v1293, %v1289
        %v1770 = vpack.c.b16 %v1294, %v1290
        %v1771 = vpack.c.b16 %v1295, %v1291
        %v1772 = vpack.c.b16 %v1300, %v1296
        %v1773 = vpack.c.b16 %v1301, %v1297
        %v1774 = vpack.c.b16 %v1302, %v1298
        %v1775 = vpack.c.b16 %v1303, %v1299
        %v1776 = vpack.c.b16 %v1308, %v1304
        %v1777 = vpack.c.b16 %v1309, %v1305
        %v1778 = vpack.c.b16 %v1310, %v1306
        %v1779 = vpack.c.b16 %v1311, %v1307
        %v1780 = vpack.c.b16 %v1316, %v1312
        %v1781 = vpack.c.b16 %v1317, %v1313
        %v1782 = vpack.c.b16 %v1318, %v1314
        %v1783 = vpack.c.b16 %v1319, %v1315
        %v1784 = vpack.c.b16 %v1324, %v1320
        %v1785 = vpack.c.b16 %v1325, %v1321
        %v1786 = vpack.c.b16 %v1326, %v1322
        %v1787 = vpack.c.b16 %v1327, %v1323
        %v1788 = vpack.c.b16 %v1332, %v1328
        %v1789 = vpack.c.b16 %v1333, %v1329
        %v1790 = vpack.c.b16 %v1334, %v1330
        %v1791 = vpack.c.b16 %v1335, %v1331
        %v1792 = vpack.c.b16 %v1340, %v1336
        %v1793 = vpack.c.b16 %v1341, %v1337
        %v1794 = vpack.c.b16 %v1342, %v1338
        %v1795 = vpack.c.b16 %v1343, %v1339
        %v1796 = vpack.c.b16 %v1348, %v1344
        %v1797 = vpack.c.b16 %v1349, %v1345
        %v1798 = vpack.c.b16 %v1350, %v1346
        %v1799 = vpack.c.b16 %v1351, %v1347
        %v1800 = vpack.c.b16 %v1356, %v1352
        %v1801 = vpack.c.b16 %v1357, %v1353
        %v1802 = vpack.c.b16 %v1358, %v1354
        %v1803 = vpack.c.b16 %v1359, %v1355
        %v1804 = vpack.c.b16 %v1364, %v1360
        %v1805 = vpack.c.b16 %v1365, %v1361
        %v1806 = vpack.c.b16 %v1366, %v1362
        %v1807 = vpack.c.b16 %v1367, %v1363
        %v1808 = vpack.c.b16 %v1372, %v1368
        %v1809 = vpack.c.b16 %v1373, %v1369
        %v1810 = vpack.c.b16 %v1374, %v1370
        %v1811 = vpack.c.b16 %v1375, %v1371
        %v1812 = vpack.c.b16 %v1380, %v1376
        %v1813 = vpack.c.b16 %v1381, %v1377
        %v1814 = vpack.c.b16 %v1382, %v1378
        %v1815 = vpack.c.b16 %v1383, %v1379
        %v1816 = vpack.c.b16 %v1388, %v1384
        %v1817 = vpack.c.b16 %v1389, %v1385
        %v1818 = vpack.c.b16 %v1390, %v1386
        %v1819 = vpack.c.b16 %v1391, %v1387
        %v1820 = vpack.c.b16 %v1396, %v1392
        %v1821 = vpack.c.b16 %v1397, %v1393
        %v1822 = vpack.c.b16 %v1398, %v1394
        %v1823 = vpack.c.b16 %v1399, %v1395
        %v1824 = vpack.c.b16 %v1404, %v1400
        %v1825 = vpack.c.b16 %v1405, %v1401
        %v1826 = vpack.c.b16 %v1406, %v1402
        %v1827 = vpack.c.b16 %v1407, %v1403
        %v1828 = vpack.c.b16 %v1412, %v1408
        %v1829 = vpack.c.b16 %v1413, %v1409
        %v1830 = vpack.c.b16 %v1414, %v1410
        %v1831 = vpack.c.b16 %v1415, %v1411
        %v1832 = vpack.c.b16 %v1420, %v1416
        %v1833 = vpack.c.b16 %v1421, %v1417
        %v1834 = vpack.c.b16 %v1422, %v1418
        %v1835 = vpack.c.b16 %v1423, %v1419
        %v1836 = vpack.c.b16 %v1428, %v1424
        %v1837 = vpack.c.b16 %v1429, %v1425
        %v1838 = vpack.c.b16 %v1430, %v1426
        %v1839 = vpack.c.b16 %v1431, %v1427
        %v1840 = vpack.c.b16 %v1436, %v1432
        %v1841 = vpack.c.b16 %v1437, %v1433
        %v1842 = vpack.c.b16 %v1438, %v1434
        %v1843 = vpack.c.b16 %v1439, %v1435
        %v1844 = vpack.c.b16 %v1444, %v1440
        %v1845 = vpack.c.b16 %v1445, %v1441
        %v1846 = vpack.c.b16 %v1446, %v1442
        %v1847 = vpack.c.b16 %v1447, %v1443
        %v1848 = vpack.c.b16 %v1452, %v1448
        %v1849 = vpack.c.b16 %v1453, %v1449
        %v1850 = vpack.c.b16 %v1454, %v1450
        %v1851 = vpack.c.b16 %v1455, %v1451
        %v1852 = vpack.c.b16 %v1460, %v1456
        %v1853 = vpack.c.b16 %v1461, %v1457
        %v1854 = vpack.c.b16 %v1462, %v1458
        %v1855 = vpack.c.b16 %v1463, %v1459
        %v1856 = vpack.c.b16 %v1468, %v1464
        %v1857 = vpack.c.b16 %v1469, %v1465
        %v1858 = vpack.c.b16 %v1470, %v1466
        %v1859 = vpack.c.b16 %v1471, %v1467
        %v1860 = vpack.c.b16 %v1476, %v1472
        %v1861 = vpack.c.b16 %v1477, %v1473
        %v1862 = vpack.c.b16 %v1478, %v1474
        %v1863 = vpack.c.b16 %v1479, %v1475
        %v1864 = vpack.c.b16 %v1484, %v1480
        %v1865 = vpack.c.b16 %v1485, %v1481
        %v1866 = vpack.c.b16 %v1486, %v1482
        %v1867 = vpack.c.b16 %v1487, %v1483
        %v1868 = vpack.c.b16 %v1492, %v1488
        %v1869 = vpack.c.b16 %v1493, %v1489
        %v1870 = vpack.c.b16 %v1494, %v1490
        %v1871 = vpack.c.b16 %v1495, %v1491
        %v1872 = vpack.c.b16 %v1500, %v1496
        %v1873 = vpack.c.b16 %v1501, %v1497
        %v1874 = vpack.c.b16 %v1502, %v1498
        %v1875 = vpack.c.b16 %v1503, %v1499
        %v1876 = vpack.c.b16 %v1508, %v1504
        %v1877 = vpack.c.b16 %v1509, %v1505
        %v1878 = vpack.c.b16 %v1510, %v1506
        %v1879 = vpack.c.b16 %v1511, %v1507
        %v1880 = vpack.c.b16 %v1516, %v1512
        %v1881 = vpack.c.b16 %v1517, %v1513
        %v1882 = vpack.c.b16 %v1518, %v1514
        %v1883 = vpack.c.b16 %v1519, %v1515
        %v1884 = vpack.c.b16 %v1524, %v1520
        %v1885 = vpack.c.b16 %v1525, %v1521
        %v1886 = vpack.c.b16 %v1526, %v1522
        %v1887 = vpack.c.b16 %v1527, %v1523
        %v1888 = vpack.c.b16 %v1532, %v1528
        %v1889 = vpack.c.b16 %v1533, %v1529
        %v1890 = vpack.c.b16 %v1534, %v1530
        %v1891 = vpack.c.b16 %v1535, %v1531
        %v1892 = vpack.c.b16 %v1540, %v1536
        %v1893 = vpack.c.b16 %v1541, %v1537
        %v1894 = vpack.c.b16 %v1542, %v1538
        %v1895 = vpack.c.b16 %v1543, %v1539
        %v1896 = vpack.c.b16 %v1548, %v1544
        %v1897 = vpack.c.b16 %v1549, %v1545
        %v1898 = vpack.c.b16 %v1550, %v1546
        %v1899 = vpack.c.b16 %v1551, %v1547
        %v1900 = vpack.c.b16 %v1556, %v1552
        %v1901 = vpack.c.b16 %v1557, %v1553
        %v1902 = vpack.c.b16 %v1558, %v1554
        %v1903 = vpack.c.b16 %v1559, %v1555
        %v1904 = vpack.c.b16 %v1564, %v1560
        %v1905 = vpack.c.b16 %v1565, %v1561
        %v1906 = vpack.c.b16 %v1566, %v1562
        %v1907 = vpack.c.b16 %v1567, %v1563
        %v1908 = vpack.c.b16 %v1572, %v1568
        %v1909 = vpack.c.b16 %v1573, %v1569
        %v1910 = vpack.c.b16 %v1574, %v1570
        %v1911 = vpack.c.b16 %v1575, %v1571
        %v1912 = vpack.c.b16 %v1580, %v1576
        %v1913 = vpack.c.b16 %v1581, %v1577
        %v1914 = vpack.c.b16 %v1582, %v1578
        %v1915 = vpack.c.b16 %v1583, %v1579
        %v1916 = vpack.c.b16 %v1588, %v1584
        %v1917 = vpack.c.b16 %v1589, %v1585
        %v1918 = vpack.c.b16 %v1590, %v1586
        %v1919 = vpack.c.b16 %v1591, %v1587
        %v1920 = vpack.c.b16 %v1596, %v1592
        %v1921 = vpack.c.b16 %v1597, %v1593
        %v1922 = vpack.c.b16 %v1598, %v1594
        %v1923 = vpack.c.b16 %v1599, %v1595
        %v1924 = vpack.c.b16 %v1604, %v1600
        %v1925 = vpack.c.b16 %v1605, %v1601
        %v1926 = vpack.c.b16 %v1606, %v1602
        %v1927 = vpack.c.b16 %v1607, %v1603
        %v1928 = vpack.c.b16 %v1612, %v1608
        %v1929 = vpack.c.b16 %v1613, %v1609
        %v1930 = vpack.c.b16 %v1614, %v1610
        %v1931 = vpack.c.b16 %v1615, %v1611
        %v1932 = vpack.c.b16 %v1620, %v1616
        %v1933 = vpack.c.b16 %v1621, %v1617
        %v1934 = vpack.c.b16 %v1622, %v1618
        %v1935 = vpack.c.b16 %v1623, %v1619
        %v1936 = vpack.c.b16 %v1628, %v1624
        %v1937 = vpack.c.b16 %v1629, %v1625
        %v1938 = vpack.c.b16 %v1630, %v1626
        %v1939 = vpack.c.b16 %v1631, %v1627
        %v1940 = vpack.c.b16 %v1636, %v1632
        %v1941 = vpack.c.b16 %v1637, %v1633
        %v1942 = vpack.c.b16 %v1638, %v1634
        %v1943 = vpack.c.b16 %v1639, %v1635
        %v1944 = vpack.c.b16 %v1644, %v1640
        %v1945 = vpack.c.b16 %v1645, %v1641
        %v1946 = vpack.c.b16 %v1646, %v1642
        %v1947 = vpack.c.b16 %v1647, %v1643
        %v1948 = vpack.c.b16 %v1652, %v1648
        %v1949 = vpack.c.b16 %v1653, %v1649
        %v1950 = vpack.c.b16 %v1654, %v1650
        %v1951 = vpack.c.b16 %v1655, %v1651
        %v1952 = vpack.c.b16 %v1660, %v1656
        %v1953 = vpack.c.b16 %v1661, %v1657
        %v1954 = vpack.c.b16 %v1662, %v1658
        %v1955 = vpack.c.b16 %v1663, %v1659
        %v1956 = vpack.c.b16 %v1668, %v1664
        %v1957 = vpack.c.b16 %v1669, %v1665
        %v1958 = vpack.c.b16 %v1670, %v1666
        %v1959 = vpack.c.b16 %v1671, %v1667
        %v1960 = vpack.c.b16 %v1676, %v1672
        %v1961 = vpack.c.b16 %v1677, %v1673
        %v1962 = vpack.c.b16 %v1678, %v1674
        %v1963 = vpack.c.b16 %v1679, %v1675
        %v1964 = vpack.c.b16 %v1684, %v1680
        %v1965 = vpack.c.b16 %v1685, %v1681
        %v1966 = vpack.c.b16 %v1686, %v1682
        %v1967 = vpack.c.b16 %v1687, %v1683
        %v1968 = vpack.c.b16 %v1692, %v1688
        %v1969 = vpack.c.b16 %v1693, %v1689
        %v1970 = vpack.c.b16 %v1694, %v1690
        %v1971 = vpack.c.b16 %v1695, %v1691
        %v1972 = vpack.c.b16 %v1700, %v1696
        %v1973 = vpack.c.b16 %v1701, %v1697
        %v1974 = vpack.c.b16 %v1702, %v1698
        %v1975 = vpack.c.b16 %v1703, %v1699
        %v1976 = vpack.c.b16 %v1708, %v1704
        %v1977 = vpack.c.b16 %v1709, %v1705
        %v1978 = vpack.c.b16 %v1710, %v1706
        %v1979 = vpack.c.b16 %v1711, %v1707
        %v1980 = vpack.c.b16 %v1716, %v1712
        %v1981 = vpack.c.b16 %v1717, %v1713
        %v1982 = vpack.c.b16 %v1718, %v1714
        %v1983 = vpack.c.b16 %v1719, %v1715
        %v1984 = vpack.c.b16 %v1724, %v1720
        %v1985 = vpack.c.b16 %v1725, %v1721
        %v1986 = vpack.c.b16 %v1726, %v1722
        %v1987 = vpack.c.b16 %v1727, %v1723
        %v1988 = vpack.c.b16 %v1732, %v1728
        %v1989 = vpack.c.b16 %v1733, %v1729
        %v1990 = vpack.c.b16 %v1734, %v1730
        %v1991 = vpack.c.b16 %v1735, %v1731
        %2248 = vmatprep.subr.bf16.mxu0 %v1737
        %2249 = vmatpush1.bf16.msra.mxu0 %v1736
        %2250 = vmatprep.subr.bf16.mxu0 %v1741
        %2251 = vmatpush1.bf16.msra.mxu0 %v1740
        %2252 = vmatprep.subr.bf16.mxu0 %v1745
        %2253 = vmatpush1.bf16.msra.mxu0 %v1744
        %2254 = vmatprep.subr.bf16.mxu0 %v1749
        %2255 = vmatpush1.bf16.msra.mxu0 %v1748
        %2256 = vmatprep.subr.bf16.mxu0 %v1753
        %2257 = vmatpush1.bf16.msra.mxu0 %v1752
        %2258 = vmatprep.subr.bf16.mxu0 %v1757
        %2259 = vmatpush1.bf16.msra.mxu0 %v1756
        %2260 = vmatprep.subr.bf16.mxu0 %v1761
        %2261 = vmatpush1.bf16.msra.mxu0 %v1760
        %2262 = vmatprep.subr.bf16.mxu0 %v1765
        %2263 = vmatpush1.bf16.msra.mxu0 %v1764
        %2264 = vmatprep.subr.bf16.mxu0 %v1769
        %2265 = vmatpush1.bf16.msra.mxu0 %v1768
        %2266 = vmatprep.subr.bf16.mxu0 %v1773
        %2267 = vmatpush1.bf16.msra.mxu0 %v1772
        %2268 = vmatprep.subr.bf16.mxu0 %v1777
        %2269 = vmatpush1.bf16.msra.mxu0 %v1776
        %2270 = vmatprep.subr.bf16.mxu0 %v1781
        %2271 = vmatpush1.bf16.msra.mxu0 %v1780
        %2272 = vmatprep.subr.bf16.mxu0 %v1785
        %2273 = vmatpush1.bf16.msra.mxu0 %v1784
        %2274 = vmatprep.subr.bf16.mxu0 %v1789
        %2275 = vmatpush1.bf16.msra.mxu0 %v1788
        %2276 = vmatprep.subr.bf16.mxu0 %v1793
        %2277 = vmatpush1.bf16.msra.mxu0 %v1792
        %2278 = vmatprep.subr.bf16.mxu0 %v1797
        %2279 = vmatpush1.bf16.msra.mxu0 %v1796
        %2280 = vmatprep.mubr.bf16.mxu0 %v675
        %2281 = vmatmul.mubr.bf16.gmra.mrb[0].mxu0 %v674
        %v2282 = vpop.f32.mrb[0].mxu0
        %v2283 = vadd.f32 %v951, %v2282
        %v2284 = vpop.f32.mrb[0].mxu0
        %v2285 = vadd.f32 %v955, %v2284
        %v2286 = vpop.f32.mrb[0].mxu0
        %v2287 = vadd.f32 %v951, %v2286
        %v2288 = vpop.f32.mrb[0].mxu0
        %v2289 = vadd.f32 %v955, %v2288
        %2290 = vmatprep.mubr.bf16.mxu0 %v683
        %2291 = vmatmul.mubr.bf16.gmra.mrb[0].mxu0 %v682
        %v2292 = vpop.f32.mrb[0].mxu0
        %v2293 = vadd.f32 %v951, %v2292
        %v2294 = vpop.f32.mrb[0].mxu0
        %v2295 = vadd.f32 %v955, %v2294
        %v2296 = vpop.f32.mrb[0].mxu0
        %v2297 = vpop.f32.mrb[0].mxu0
        %2298 = vdwg.mxu0
        %2299 = vmatprep.subr.bf16.mxu0 %v1801
        %2300 = vmatpush1.bf16.msra.mxu0 %v1800
        %2301 = vmatprep.subr.bf16.mxu0 %v1805
        %2302 = vmatpush1.bf16.msra.mxu0 %v1804
        %2303 = vmatprep.subr.bf16.mxu0 %v1809
        %2304 = vmatpush1.bf16.msra.mxu0 %v1808
        %2305 = vmatprep.subr.bf16.mxu0 %v1813
        %2306 = vmatpush1.bf16.msra.mxu0 %v1812
        %2307 = vmatprep.subr.bf16.mxu0 %v1817
        %2308 = vmatpush1.bf16.msra.mxu0 %v1816
        %2309 = vmatprep.subr.bf16.mxu0 %v1821
        %2310 = vmatpush1.bf16.msra.mxu0 %v1820
        %2311 = vmatprep.subr.bf16.mxu0 %v1825
        %2312 = vmatpush1.bf16.msra.mxu0 %v1824
        %2313 = vmatprep.subr.bf16.mxu0 %v1829
        %2314 = vmatpush1.bf16.msra.mxu0 %v1828
        %2315 = vmatprep.subr.bf16.mxu0 %v1833
        %2316 = vmatpush1.bf16.msra.mxu0 %v1832
        %2317 = vmatprep.subr.bf16.mxu0 %v1837
        %2318 = vmatpush1.bf16.msra.mxu0 %v1836
        %2319 = vmatprep.subr.bf16.mxu0 %v1841
        %2320 = vmatpush1.bf16.msra.mxu0 %v1840
        %2321 = vmatprep.subr.bf16.mxu0 %v1845
        %2322 = vmatpush1.bf16.msra.mxu0 %v1844
        %2323 = vmatprep.subr.bf16.mxu0 %v1849
        %2324 = vmatpush1.bf16.msra.mxu0 %v1848
        %2325 = vmatprep.subr.bf16.mxu0 %v1853
        %2326 = vmatpush1.bf16.msra.mxu0 %v1852
        %2327 = vmatprep.subr.bf16.mxu0 %v1857
        %2328 = vmatpush1.bf16.msra.mxu0 %v1856
        %2329 = vmatprep.subr.bf16.mxu0 %v1861
        %2330 = vmatpush1.bf16.msra.mxu0 %v1860
        %2331 = vmatprep.mubr.bf16.mxu0 %v677
        %2332 = vmatmul.mubr.bf16.gmra.mrb[0].mxu0 %v676
        %v2333 = vpop.f32.mrb[0].mxu0
        %v2334 = vadd.f32 %v2283, %v2333
        %v2335 = vpop.f32.mrb[0].mxu0
        %v2336 = vadd.f32 %v2285, %v2335
        %v2337 = vpop.f32.mrb[0].mxu0
        %v2338 = vadd.f32 %v2287, %v2337
        %v2339 = vpop.f32.mrb[0].mxu0
        %v2340 = vadd.f32 %v2289, %v2339
        %2341 = vmatprep.mubr.bf16.mxu0 %v685
        %2342 = vmatmul.mubr.bf16.gmra.mrb[0].mxu0 %v684
        %v2343 = vpop.f32.mrb[0].mxu0
        %v2344 = vadd.f32 %v2293, %v2343
        %v2345 = vpop.f32.mrb[0].mxu0
        %v2346 = vadd.f32 %v2295, %v2345
        %v2347 = vpop.f32.mrb[0].mxu0
        %v2348 = vpop.f32.mrb[0].mxu0
        %2349 = vdwg.mxu0
        %2350 = vmatprep.subr.bf16.mxu0 %v1865
        %2351 = vmatpush1.bf16.msra.mxu0 %v1864
        %2352 = vmatprep.subr.bf16.mxu0 %v1869
        %2353 = vmatpush1.bf16.msra.mxu0 %v1868
        %2354 = vmatprep.subr.bf16.mxu0 %v1873
        %2355 = vmatpush1.bf16.msra.mxu0 %v1872
        %2356 = vmatprep.subr.bf16.mxu0 %v1877
        %2357 = vmatpush1.bf16.msra.mxu0 %v1876
        %2358 = vmatprep.subr.bf16.mxu0 %v1881
        %2359 = vmatpush1.bf16.msra.mxu0 %v1880
        %2360 = vmatprep.subr.bf16.mxu0 %v1885
        %2361 = vmatpush1.bf16.msra.mxu0 %v1884
        %2362 = vmatprep.subr.bf16.mxu0 %v1889
        %2363 = vmatpush1.bf16.msra.mxu0 %v1888
        %2364 = vmatprep.subr.bf16.mxu0 %v1893
        %2365 = vmatpush1.bf16.msra.mxu0 %v1892
        %2366 = vmatprep.subr.bf16.mxu0 %v1897
        %2367 = vmatpush1.bf16.msra.mxu0 %v1896
        %2368 = vmatprep.subr.bf16.mxu0 %v1901
        %2369 = vmatpush1.bf16.msra.mxu0 %v1900
        %2370 = vmatprep.subr.bf16.mxu0 %v1905
        %2371 = vmatpush1.bf16.msra.mxu0 %v1904
        %2372 = vmatprep.subr.bf16.mxu0 %v1909
        %2373 = vmatpush1.bf16.msra.mxu0 %v1908
        %2374 = vmatprep.subr.bf16.mxu0 %v1913
        %2375 = vmatpush1.bf16.msra.mxu0 %v1912
        %2376 = vmatprep.subr.bf16.mxu0 %v1917
        %2377 = vmatpush1.bf16.msra.mxu0 %v1916
        %2378 = vmatprep.subr.bf16.mxu0 %v1921
        %2379 = vmatpush1.bf16.msra.mxu0 %v1920
        %2380 = vmatprep.subr.bf16.mxu0 %v1925
        %2381 = vmatpush1.bf16.msra.mxu0 %v1924
        %2382 = vmatprep.mubr.bf16.mxu0 %v679
        %2383 = vmatmul.mubr.bf16.gmra.mrb[0].mxu0 %v678
        %v2384 = vpop.f32.mrb[0].mxu0
        %v2385 = vadd.f32 %v2334, %v2384
        %v2386 = vpop.f32.mrb[0].mxu0
        %v2387 = vadd.f32 %v2336, %v2386
        %v2388 = vpop.f32.mrb[0].mxu0
        %v2389 = vadd.f32 %v2338, %v2388
        %v2390 = vpop.f32.mrb[0].mxu0
        %v2391 = vadd.f32 %v2340, %v2390
        %2392 = vmatprep.mubr.bf16.mxu0 %v687
        %2393 = vmatmul.mubr.bf16.gmra.mrb[0].mxu0 %v686
        %v2394 = vpop.f32.mrb[0].mxu0
        %v2395 = vadd.f32 %v2344, %v2394
        %v2396 = vpop.f32.mrb[0].mxu0
        %v2397 = vadd.f32 %v2346, %v2396
        %v2398 = vpop.f32.mrb[0].mxu0
        %v2399 = vpop.f32.mrb[0].mxu0
        %2400 = vdwg.mxu0
        %2401 = vmatprep.subr.bf16.mxu0 %v1929
        %2402 = vmatpush1.bf16.msra.mxu0 %v1928
        %2403 = vmatprep.subr.bf16.mxu0 %v1933
        %2404 = vmatpush1.bf16.msra.mxu0 %v1932
        %2405 = vmatprep.subr.bf16.mxu0 %v1937
        %2406 = vmatpush1.bf16.msra.mxu0 %v1936
        %2407 = vmatprep.subr.bf16.mxu0 %v1941
        %2408 = vmatpush1.bf16.msra.mxu0 %v1940
        %2409 = vmatprep.subr.bf16.mxu0 %v1945
        %2410 = vmatpush1.bf16.msra.mxu0 %v1944
        %2411 = vmatprep.subr.bf16.mxu0 %v1949
        %2412 = vmatpush1.bf16.msra.mxu0 %v1948
        %2413 = vmatprep.subr.bf16.mxu0 %v1953
        %2414 = vmatpush1.bf16.msra.mxu0 %v1952
        %2415 = vmatprep.subr.bf16.mxu0 %v1957
        %2416 = vmatpush1.bf16.msra.mxu0 %v1956
        %2417 = vmatprep.subr.bf16.mxu0 %v1961
        %2418 = vmatpush1.bf16.msra.mxu0 %v1960
        %2419 = vmatprep.subr.bf16.mxu0 %v1965
        %2420 = vmatpush1.bf16.msra.mxu0 %v1964
        %2421 = vmatprep.subr.bf16.mxu0 %v1969
        %2422 = vmatpush1.bf16.msra.mxu0 %v1968
        %2423 = vmatprep.subr.bf16.mxu0 %v1973
        %2424 = vmatpush1.bf16.msra.mxu0 %v1972
        %2425 = vmatprep.subr.bf16.mxu0 %v1977
        %2426 = vmatpush1.bf16.msra.mxu0 %v1976
        %2427 = vmatprep.subr.bf16.mxu0 %v1981
        %2428 = vmatpush1.bf16.msra.mxu0 %v1980
        %2429 = vmatprep.subr.bf16.mxu0 %v1985
        %2430 = vmatpush1.bf16.msra.mxu0 %v1984
        %2431 = vmatprep.subr.bf16.mxu0 %v1989
        %2432 = vmatpush1.bf16.msra.mxu0 %v1988
        %2433 = vmatprep.mubr.bf16.mxu0 %v681
        %2434 = vmatmul.mubr.bf16.gmra.mrb[0].mxu0 %v680
        %v2435 = vpop.f32.mrb[0].mxu0
        %v2436 = vadd.f32 %v2385, %v2435
        %v2437 = vpop.f32.mrb[0].mxu0
        %v2438 = vadd.f32 %v2387, %v2437
        %v2439 = vpop.f32.mrb[0].mxu0
        %v2440 = vadd.f32 %v2389, %v2439
        %v2441 = vpop.f32.mrb[0].mxu0
        %v2442 = vadd.f32 %v2391, %v2441
        %2443 = vmatprep.mubr.bf16.mxu0 %v689
        %2444 = vmatmul.mubr.bf16.gmra.mrb[0].mxu0 %v688
        %v2445 = vpop.f32.mrb[0].mxu0
        %v2446 = vadd.f32 %v2395, %v2445
        %v2447 = vpop.f32.mrb[0].mxu0
        %v2448 = vadd.f32 %v2397, %v2447
        %v2449 = vpop.f32.mrb[0].mxu0
        %v2450 = vpop.f32.mrb[0].mxu0
        %2451 = vdwg.mxu0
        %2452 = vmatprep.subr.bf16.mxu0 %v1739
        %2453 = vmatpush1.bf16.msra.mxu0 %v1738
        %2454 = vmatprep.subr.bf16.mxu0 %v1743
        %2455 = vmatpush1.bf16.msra.mxu0 %v1742
        %2456 = vmatprep.subr.bf16.mxu0 %v1747
        %2457 = vmatpush1.bf16.msra.mxu0 %v1746
        %2458 = vmatprep.subr.bf16.mxu0 %v1751
        %2459 = vmatpush1.bf16.msra.mxu0 %v1750
        %2460 = vmatprep.subr.bf16.mxu0 %v1755
        %2461 = vmatpush1.bf16.msra.mxu0 %v1754
        %2462 = vmatprep.subr.bf16.mxu0 %v1759
        %2463 = vmatpush1.bf16.msra.mxu0 %v1758
        %2464 = vmatprep.subr.bf16.mxu0 %v1763
        %2465 = vmatpush1.bf16.msra.mxu0 %v1762
        %2466 = vmatprep.subr.bf16.mxu0 %v1767
        %2467 = vmatpush1.bf16.msra.mxu0 %v1766
        %2468 = vmatprep.subr.bf16.mxu0 %v1771
        %2469 = vmatpush1.bf16.msra.mxu0 %v1770
        %2470 = vmatprep.subr.bf16.mxu0 %v1775
        %2471 = vmatpush1.bf16.msra.mxu0 %v1774
        %2472 = vmatprep.subr.bf16.mxu0 %v1779
        %2473 = vmatpush1.bf16.msra.mxu0 %v1778
        %2474 = vmatprep.subr.bf16.mxu0 %v1783
        %2475 = vmatpush1.bf16.msra.mxu0 %v1782
        %2476 = vmatprep.subr.bf16.mxu0 %v1787
        %2477 = vmatpush1.bf16.msra.mxu0 %v1786
        %2478 = vmatprep.subr.bf16.mxu0 %v1791
        %2479 = vmatpush1.bf16.msra.mxu0 %v1790
        %2480 = vmatprep.subr.bf16.mxu0 %v1795
        %2481 = vmatpush1.bf16.msra.mxu0 %v1794
        %2482 = vmatprep.subr.bf16.mxu0 %v1799
        %2483 = vmatpush1.bf16.msra.mxu0 %v1798
        %2484 = vmatprep.mubr.bf16.mxu0 %v675
        %2485 = vmatmul.mubr.bf16.gmra.mrb[0].mxu0 %v674
        %v2486 = vpop.f32.mrb[0].mxu0
        %v2487 = vadd.f32 %v959, %v2486
        %v2488 = vpop.f32.mrb[0].mxu0
        %v2489 = vadd.f32 %v963, %v2488
        %v2490 = vpop.f32.mrb[0].mxu0
        %v2491 = vadd.f32 %v959, %v2490
        %v2492 = vpop.f32.mrb[0].mxu0
        %v2493 = vadd.f32 %v963, %v2492
        %2494 = vmatprep.mubr.bf16.mxu0 %v683
        %2495 = vmatmul.mubr.bf16.gmra.mrb[0].mxu0 %v682
        %v2496 = vpop.f32.mrb[0].mxu0
        %v2497 = vadd.f32 %v959, %v2496
        %v2498 = vpop.f32.mrb[0].mxu0
        %v2499 = vadd.f32 %v963, %v2498
        %v2500 = vpop.f32.mrb[0].mxu0
        %v2501 = vpop.f32.mrb[0].mxu0
        %2502 = vdwg.mxu0
        %2503 = vmatprep.subr.bf16.mxu0 %v1803
        %2504 = vmatpush1.bf16.msra.mxu0 %v1802
        %2505 = vmatprep.subr.bf16.mxu0 %v1807
        %2506 = vmatpush1.bf16.msra.mxu0 %v1806
        %2507 = vmatprep.subr.bf16.mxu0 %v1811
        %2508 = vmatpush1.bf16.msra.mxu0 %v1810
        %2509 = vmatprep.subr.bf16.mxu0 %v1815
        %2510 = vmatpush1.bf16.msra.mxu0 %v1814
        %2511 = vmatprep.subr.bf16.mxu0 %v1819
        %2512 = vmatpush1.bf16.msra.mxu0 %v1818
        %2513 = vmatprep.subr.bf16.mxu0 %v1823
        %2514 = vmatpush1.bf16.msra.mxu0 %v1822
        %2515 = vmatprep.subr.bf16.mxu0 %v1827
        %2516 = vmatpush1.bf16.msra.mxu0 %v1826
        %2517 = vmatprep.subr.bf16.mxu0 %v1831
        %2518 = vmatpush1.bf16.msra.mxu0 %v1830
        %2519 = vmatprep.subr.bf16.mxu0 %v1835
        %2520 = vmatpush1.bf16.msra.mxu0 %v1834
        %2521 = vmatprep.subr.bf16.mxu0 %v1839
        %2522 = vmatpush1.bf16.msra.mxu0 %v1838
        %2523 = vmatprep.subr.bf16.mxu0 %v1843
        %2524 = vmatpush1.bf16.msra.mxu0 %v1842
        %2525 = vmatprep.subr.bf16.mxu0 %v1847
        %2526 = vmatpush1.bf16.msra.mxu0 %v1846
        %2527 = vmatprep.subr.bf16.mxu0 %v1851
        %2528 = vmatpush1.bf16.msra.mxu0 %v1850
        %2529 = vmatprep.subr.bf16.mxu0 %v1855
        %2530 = vmatpush1.bf16.msra.mxu0 %v1854
        %2531 = vmatprep.subr.bf16.mxu0 %v1859
        %2532 = vmatpush1.bf16.msra.mxu0 %v1858
        %2533 = vmatprep.subr.bf16.mxu0 %v1863
        %2534 = vmatpush1.bf16.msra.mxu0 %v1862
        %2535 = vmatprep.mubr.bf16.mxu0 %v677
        %2536 = vmatmul.mubr.bf16.gmra.mrb[0].mxu0 %v676
        %v2537 = vpop.f32.mrb[0].mxu0
        %v2538 = vadd.f32 %v2487, %v2537
        %v2539 = vpop.f32.mrb[0].mxu0
        %v2540 = vadd.f32 %v2489, %v2539
        %v2541 = vpop.f32.mrb[0].mxu0
        %v2542 = vadd.f32 %v2491, %v2541
        %v2543 = vpop.f32.mrb[0].mxu0
        %v2544 = vadd.f32 %v2493, %v2543
        %2545 = vmatprep.mubr.bf16.mxu0 %v685
        %2546 = vmatmul.mubr.bf16.gmra.mrb[0].mxu0 %v684
        %v2547 = vpop.f32.mrb[0].mxu0
        %v2548 = vadd.f32 %v2497, %v2547
        %v2549 = vpop.f32.mrb[0].mxu0
        %v2550 = vadd.f32 %v2499, %v2549
        %v2551 = vpop.f32.mrb[0].mxu0
        %v2552 = vpop.f32.mrb[0].mxu0
        %2553 = vdwg.mxu0
        %2554 = vmatprep.subr.bf16.mxu0 %v1867
        %2555 = vmatpush1.bf16.msra.mxu0 %v1866
        %2556 = vmatprep.subr.bf16.mxu0 %v1871
        %2557 = vmatpush1.bf16.msra.mxu0 %v1870
        %2558 = vmatprep.subr.bf16.mxu0 %v1875
        %2559 = vmatpush1.bf16.msra.mxu0 %v1874
        %2560 = vmatprep.subr.bf16.mxu0 %v1879
        %2561 = vmatpush1.bf16.msra.mxu0 %v1878
        %2562 = vmatprep.subr.bf16.mxu0 %v1883
        %2563 = vmatpush1.bf16.msra.mxu0 %v1882
        %2564 = vmatprep.subr.bf16.mxu0 %v1887
        %2565 = vmatpush1.bf16.msra.mxu0 %v1886
        %2566 = vmatprep.subr.bf16.mxu0 %v1891
        %2567 = vmatpush1.bf16.msra.mxu0 %v1890
        %2568 = vmatprep.subr.bf16.mxu0 %v1895
        %2569 = vmatpush1.bf16.msra.mxu0 %v1894
        %2570 = vmatprep.subr.bf16.mxu0 %v1899
        %2571 = vmatpush1.bf16.msra.mxu0 %v1898
        %2572 = vmatprep.subr.bf16.mxu0 %v1903
        %2573 = vmatpush1.bf16.msra.mxu0 %v1902
        %2574 = vmatprep.subr.bf16.mxu0 %v1907
        %2575 = vmatpush1.bf16.msra.mxu0 %v1906
        %2576 = vmatprep.subr.bf16.mxu0 %v1911
        %2577 = vmatpush1.bf16.msra.mxu0 %v1910
        %2578 = vmatprep.subr.bf16.mxu0 %v1915
        %2579 = vmatpush1.bf16.msra.mxu0 %v1914
        %2580 = vmatprep.subr.bf16.mxu0 %v1919
        %2581 = vmatpush1.bf16.msra.mxu0 %v1918
        %2582 = vmatprep.subr.bf16.mxu0 %v1923
        %2583 = vmatpush1.bf16.msra.mxu0 %v1922
        %2584 = vmatprep.subr.bf16.mxu0 %v1927
        %2585 = vmatpush1.bf16.msra.mxu0 %v1926
        %2586 = vmatprep.mubr.bf16.mxu0 %v679
        %2587 = vmatmul.mubr.bf16.gmra.mrb[0].mxu0 %v678
        %v2588 = vpop.f32.mrb[0].mxu0
        %v2589 = vadd.f32 %v2538, %v2588
        %v2590 = vpop.f32.mrb[0].mxu0
        %v2591 = vadd.f32 %v2540, %v2590
        %v2592 = vpop.f32.mrb[0].mxu0
        %v2593 = vadd.f32 %v2542, %v2592
        %v2594 = vpop.f32.mrb[0].mxu0
        %v2595 = vadd.f32 %v2544, %v2594
        %2596 = vmatprep.mubr.bf16.mxu0 %v687
        %2597 = vmatmul.mubr.bf16.gmra.mrb[0].mxu0 %v686
        %v2598 = vpop.f32.mrb[0].mxu0
        %v2599 = vadd.f32 %v2548, %v2598
        %v2600 = vpop.f32.mrb[0].mxu0
        %v2601 = vadd.f32 %v2550, %v2600
        %v2602 = vpop.f32.mrb[0].mxu0
        %v2603 = vpop.f32.mrb[0].mxu0
        %2604 = vdwg.mxu0
        %2605 = vmatprep.subr.bf16.mxu0 %v1931
        %2606 = vmatpush1.bf16.msra.mxu0 %v1930
        %2607 = vmatprep.subr.bf16.mxu0 %v1935
        %2608 = vmatpush1.bf16.msra.mxu0 %v1934
        %2609 = vmatprep.subr.bf16.mxu0 %v1939
        %2610 = vmatpush1.bf16.msra.mxu0 %v1938
        %2611 = vmatprep.subr.bf16.mxu0 %v1943
        %2612 = vmatpush1.bf16.msra.mxu0 %v1942
        %2613 = vmatprep.subr.bf16.mxu0 %v1947
        %2614 = vmatpush1.bf16.msra.mxu0 %v1946
        %2615 = vmatprep.subr.bf16.mxu0 %v1951
        %2616 = vmatpush1.bf16.msra.mxu0 %v1950
        %2617 = vmatprep.subr.bf16.mxu0 %v1955
        %2618 = vmatpush1.bf16.msra.mxu0 %v1954
        %2619 = vmatprep.subr.bf16.mxu0 %v1959
        %2620 = vmatpush1.bf16.msra.mxu0 %v1958
        %2621 = vmatprep.subr.bf16.mxu0 %v1963
        %2622 = vmatpush1.bf16.msra.mxu0 %v1962
        %2623 = vmatprep.subr.bf16.mxu0 %v1967
        %2624 = vmatpush1.bf16.msra.mxu0 %v1966
        %2625 = vmatprep.subr.bf16.mxu0 %v1971
        %2626 = vmatpush1.bf16.msra.mxu0 %v1970
        %2627 = vmatprep.subr.bf16.mxu0 %v1975
        %2628 = vmatpush1.bf16.msra.mxu0 %v1974
        %2629 = vmatprep.subr.bf16.mxu0 %v1979
        %2630 = vmatpush1.bf16.msra.mxu0 %v1978
        %2631 = vmatprep.subr.bf16.mxu0 %v1983
        %2632 = vmatpush1.bf16.msra.mxu0 %v1982
        %2633 = vmatprep.subr.bf16.mxu0 %v1987
        %2634 = vmatpush1.bf16.msra.mxu0 %v1986
        %2635 = vmatprep.subr.bf16.mxu0 %v1991
        %2636 = vmatpush1.bf16.msra.mxu0 %v1990
        %2637 = vmatprep.mubr.bf16.mxu0 %v681
        %2638 = vmatmul.mubr.bf16.gmra.mrb[0].mxu0 %v680
        %v2639 = vpop.f32.mrb[0].mxu0
        %v2640 = vadd.f32 %v2589, %v2639
        %v2641 = vpop.f32.mrb[0].mxu0
        %v2642 = vadd.f32 %v2591, %v2641
        %v2643 = vpop.f32.mrb[0].mxu0
        %v2644 = vadd.f32 %v2593, %v2643
        %v2645 = vpop.f32.mrb[0].mxu0
        %v2646 = vadd.f32 %v2595, %v2645
        %2647 = vmatprep.mubr.bf16.mxu0 %v689
        %2648 = vmatmul.mubr.bf16.gmra.mrb[0].mxu0 %v688
        %v2649 = vpop.f32.mrb[0].mxu0
        %v2650 = vadd.f32 %v2599, %v2649
        %v2651 = vpop.f32.mrb[0].mxu0
        %v2652 = vadd.f32 %v2601, %v2651
        %v2653 = vpop.f32.mrb[0].mxu0
        %v2654 = vpop.f32.mrb[0].mxu0
        %2655 = vdwg.mxu0
        %v2656 = vpack.c.bf16 %v2440, %v2436
        %v2657 = vpack.c.bf16 %v2442, %v2438
        %v2658 = vpack.c.bf16 %v2644, %v2640
        %v2659 = vpack.c.bf16 %v2646, %v2642
        %v2660 = vpack.c.bf16 %v2446, %v2446
        %v2661 = vpack.c.bf16 %v2448, %v2448
        %v2662 = vpack.c.bf16 %v2650, %v2650
        %v2663 = vpack.c.bf16 %v2652, %v2652
        %v2664 = vld [vmem:[%s5] sm:$0xf]
        %v2665 = vld [vmem:[%s5 + $0x4] sm:$0xf]
        %v2666 = vld [vmem:[%s5 + $0x8] sm:$0xf]
        %v2667 = vld [vmem:[%s5 + $0xc] sm:$0xf]
        %v2668 = vld [vmem:[%s5 + $0x10] sm:$0xf]
        %v2669 = vld [vmem:[%s5 + $0x14] sm:$0xf]
        %v2670 = vld [vmem:[%s5 + $0x18] sm:$0xf]
        %v2671 = vld [vmem:[%s5 + $0x1c] sm:$0xf]
        %v2672 = vld [vmem:[%s5 + $0x20] sm:$0xf]
        %v2673 = vld [vmem:[%s5 + $0x24] sm:$0xf]
        %v2674 = vld [vmem:[%s5 + $0x28] sm:$0xf]
        %v2675 = vld [vmem:[%s5 + $0x2c] sm:$0xf]
        %v2676 = vld [vmem:[%s5 + $0x30] sm:$0xf]
        %v2677 = vld [vmem:[%s5 + $0x34] sm:$0xf]
        %v2678 = vld [vmem:[%s5 + $0x38] sm:$0xf]
        %v2679 = vld [vmem:[%s5 + $0x3c] sm:$0xf]
        %v2680 = vld [vmem:[%s5 + $0x40] sm:$0xf]
        %v2681 = vld [vmem:[%s5 + $0x44] sm:$0xf]
        %v2682 = vld [vmem:[%s5 + $0x48] sm:$0xf]
        %v2683 = vld [vmem:[%s5 + $0x4c] sm:$0xf]
        %v2684 = vld [vmem:[%s5 + $0x50] sm:$0xf]
        %v2685 = vld [vmem:[%s5 + $0x54] sm:$0xf]
        %v2686 = vld [vmem:[%s5 + $0x58] sm:$0xf]
        %v2687 = vld [vmem:[%s5 + $0x5c] sm:$0xf]
        %v2688 = vld [vmem:[%s5 + $0x60] sm:$0xf]
        %v2689 = vld [vmem:[%s5 + $0x64] sm:$0xf]
        %v2690 = vld [vmem:[%s5 + $0x68] sm:$0xf]
        %v2691 = vld [vmem:[%s5 + $0x6c] sm:$0xf]
        %v2692 = vld [vmem:[%s5 + $0x70] sm:$0xf]
        %v2693 = vld [vmem:[%s5 + $0x74] sm:$0xf]
        %v2694 = vld [vmem:[%s5 + $0x78] sm:$0xf]
        %v2695 = vld [vmem:[%s5 + $0x7c] sm:$0xf]
        %v2696 = vld [vmem:[%s5 + $0x80] sm:$0xf]
        %v2697 = vld [vmem:[%s5 + $0x84] sm:$0xf]
        %v2698 = vld [vmem:[%s5 + $0x88] sm:$0xf]
        %v2699 = vld [vmem:[%s5 + $0x8c] sm:$0xf]
        %v2700 = vld [vmem:[%s5 + $0x90] sm:$0xf]
        %v2701 = vld [vmem:[%s5 + $0x94] sm:$0xf]
        %v2702 = vld [vmem:[%s5 + $0x98] sm:$0xf]
        %v2703 = vld [vmem:[%s5 + $0x9c] sm:$0xf]
        %v2704 = vld [vmem:[%s5 + $0xa0] sm:$0xf]
        %v2705 = vld [vmem:[%s5 + $0xa4] sm:$0xf]
        %v2706 = vld [vmem:[%s5 + $0xa8] sm:$0xf]
        %v2707 = vld [vmem:[%s5 + $0xac] sm:$0xf]
        %v2708 = vld [vmem:[%s5 + $0xb0] sm:$0xf]
        %v2709 = vld [vmem:[%s5 + $0xb4] sm:$0xf]
        %v2710 = vld [vmem:[%s5 + $0xb8] sm:$0xf]
        %v2711 = vld [vmem:[%s5 + $0xbc] sm:$0xf]
        %v2712 = vld [vmem:[%s5 + $0xc0] sm:$0xf]
        %v2713 = vld [vmem:[%s5 + $0xc4] sm:$0xf]
        %v2714 = vld [vmem:[%s5 + $0xc8] sm:$0xf]
        %v2715 = vld [vmem:[%s5 + $0xcc] sm:$0xf]
        %v2716 = vld [vmem:[%s5 + $0xd0] sm:$0xf]
        %v2717 = vld [vmem:[%s5 + $0xd4] sm:$0xf]
        %v2718 = vld [vmem:[%s5 + $0xd8] sm:$0xf]
        %v2719 = vld [vmem:[%s5 + $0xdc] sm:$0xf]
        %v2720 = vld [vmem:[%s5 + $0xe0] sm:$0xf]
        %v2721 = vld [vmem:[%s5 + $0xe4] sm:$0xf]
        %v2722 = vld [vmem:[%s5 + $0xe8] sm:$0xf]
        %v2723 = vld [vmem:[%s5 + $0xec] sm:$0xf]
        %v2724 = vld [vmem:[%s5 + $0xf0] sm:$0xf]
        %v2725 = vld [vmem:[%s5 + $0xf4] sm:$0xf]
        %v2726 = vld [vmem:[%s5 + $0xf8] sm:$0xf]
        %v2727 = vld [vmem:[%s5 + $0xfc] sm:$0xf]
        %v2728 = vld [vmem:[%s6] sm:$0x1]
        %v2730 = vlaneseq
        %v2731 = vshrl.u32 %v2730, 7
        %v2732 = vsub.s32 0, %v2731
        %v2733 = vrot.slane %v2728, %v2732
        %v2799 = vunpack.c.l.b16 %v2664
        %v2800 = vunpack.c.l.b16 %v2665
        %v2801 = vunpack.c.l.b16 %v2666
        %v2802 = vunpack.c.l.b16 %v2667
        %v2803 = vunpack.c.l.b16 %v2668
        %v2804 = vunpack.c.l.b16 %v2669
        %v2805 = vunpack.c.l.b16 %v2670
        %v2806 = vunpack.c.l.b16 %v2671
        %v2807 = vunpack.c.l.b16 %v2672
        %v2808 = vunpack.c.l.b16 %v2673
        %v2809 = vunpack.c.l.b16 %v2674
        %v2810 = vunpack.c.l.b16 %v2675
        %v2811 = vunpack.c.l.b16 %v2676
        %v2812 = vunpack.c.l.b16 %v2677
        %v2813 = vunpack.c.l.b16 %v2678
        %v2814 = vunpack.c.l.b16 %v2679
        %v2815 = vunpack.c.l.b16 %v2680
        %v2816 = vunpack.c.l.b16 %v2681
        %v2817 = vunpack.c.l.b16 %v2682
        %v2818 = vunpack.c.l.b16 %v2683
        %v2819 = vunpack.c.l.b16 %v2684
        %v2820 = vunpack.c.l.b16 %v2685
        %v2821 = vunpack.c.l.b16 %v2686
        %v2822 = vunpack.c.l.b16 %v2687
        %v2823 = vunpack.c.l.b16 %v2688
        %v2824 = vunpack.c.l.b16 %v2689
        %v2825 = vunpack.c.l.b16 %v2690
        %v2826 = vunpack.c.l.b16 %v2691
        %v2827 = vunpack.c.l.b16 %v2692
        %v2828 = vunpack.c.l.b16 %v2693
        %v2829 = vunpack.c.l.b16 %v2694
        %v2830 = vunpack.c.l.b16 %v2695
        %v2831 = vunpack.c.l.b16 %v2696
        %v2832 = vunpack.c.l.b16 %v2697
        %v2833 = vunpack.c.l.b16 %v2698
        %v2834 = vunpack.c.l.b16 %v2699
        %v2835 = vunpack.c.l.b16 %v2700
        %v2836 = vunpack.c.l.b16 %v2701
        %v2837 = vunpack.c.l.b16 %v2702
        %v2838 = vunpack.c.l.b16 %v2703
        %v2839 = vunpack.c.l.b16 %v2704
        %v2840 = vunpack.c.l.b16 %v2705
        %v2841 = vunpack.c.l.b16 %v2706
        %v2842 = vunpack.c.l.b16 %v2707
        %v2843 = vunpack.c.l.b16 %v2708
        %v2844 = vunpack.c.l.b16 %v2709
        %v2845 = vunpack.c.l.b16 %v2710
        %v2846 = vunpack.c.l.b16 %v2711
        %v2847 = vunpack.c.l.b16 %v2712
        %v2848 = vunpack.c.l.b16 %v2713
        %v2849 = vunpack.c.l.b16 %v2714
        %v2850 = vunpack.c.l.b16 %v2715
        %v2851 = vunpack.c.l.b16 %v2716
        %v2852 = vunpack.c.l.b16 %v2717
        %v2853 = vunpack.c.l.b16 %v2718
        %v2854 = vunpack.c.l.b16 %v2719
        %v2855 = vunpack.c.l.b16 %v2720
        %v2856 = vunpack.c.l.b16 %v2721
        %v2857 = vunpack.c.l.b16 %v2722
        %v2858 = vunpack.c.l.b16 %v2723
        %v2859 = vunpack.c.l.b16 %v2724
        %v2860 = vunpack.c.l.b16 %v2725
        %v2861 = vunpack.c.l.b16 %v2726
        %v2862 = vunpack.c.l.b16 %v2727
        %v2863 = vpack.c.b16 %v2800, %v2799
        %v2864 = vpack.c.b16 %v2802, %v2801
        %v2865 = vpack.c.b16 %v2804, %v2803
        %v2866 = vpack.c.b16 %v2806, %v2805
        %v2867 = vpack.c.b16 %v2808, %v2807
        %v2868 = vpack.c.b16 %v2810, %v2809
        %v2869 = vpack.c.b16 %v2812, %v2811
        %v2870 = vpack.c.b16 %v2814, %v2813
        %v2871 = vpack.c.b16 %v2816, %v2815
        %v2872 = vpack.c.b16 %v2818, %v2817
        %v2873 = vpack.c.b16 %v2820, %v2819
        %v2874 = vpack.c.b16 %v2822, %v2821
        %v2875 = vpack.c.b16 %v2824, %v2823
        %v2876 = vpack.c.b16 %v2826, %v2825
        %v2877 = vpack.c.b16 %v2828, %v2827
        %v2878 = vpack.c.b16 %v2830, %v2829
        %v2879 = vpack.c.b16 %v2832, %v2831
        %v2880 = vpack.c.b16 %v2834, %v2833
        %v2881 = vpack.c.b16 %v2836, %v2835
        %v2882 = vpack.c.b16 %v2838, %v2837
        %v2883 = vpack.c.b16 %v2840, %v2839
        %v2884 = vpack.c.b16 %v2842, %v2841
        %v2885 = vpack.c.b16 %v2844, %v2843
        %v2886 = vpack.c.b16 %v2846, %v2845
        %v2887 = vpack.c.b16 %v2848, %v2847
        %v2888 = vpack.c.b16 %v2850, %v2849
        %v2889 = vpack.c.b16 %v2852, %v2851
        %v2890 = vpack.c.b16 %v2854, %v2853
        %v2891 = vpack.c.b16 %v2856, %v2855
        %v2892 = vpack.c.b16 %v2858, %v2857
        %v2893 = vpack.c.b16 %v2860, %v2859
        %v2894 = vpack.c.b16 %v2862, %v2861
        %2927 = vmatprep.subr.bf16.mxu0 0
        %2928 = vmatpush1.bf16.msra.mxu0 %v2863
        %2929 = vmatprep.subr.bf16.mxu0 0
        %2930 = vmatpush1.bf16.msra.mxu0 %v2864
        %2931 = vmatprep.subr.bf16.mxu0 0
        %2932 = vmatpush1.bf16.msra.mxu0 %v2865
        %2933 = vmatprep.subr.bf16.mxu0 0
        %2934 = vmatpush1.bf16.msra.mxu0 %v2866
        %2935 = vmatprep.subr.bf16.mxu0 0
        %2936 = vmatpush1.bf16.msra.mxu0 %v2867
        %2937 = vmatprep.subr.bf16.mxu0 0
        %2938 = vmatpush1.bf16.msra.mxu0 %v2868
        %2939 = vmatprep.subr.bf16.mxu0 0
        %2940 = vmatpush1.bf16.msra.mxu0 %v2869
        %2941 = vmatprep.subr.bf16.mxu0 0
        %2942 = vmatpush1.bf16.msra.mxu0 %v2870
        %2943 = vmatprep.subr.bf16.mxu0 0
        %2944 = vmatpush1.bf16.msra.mxu0 %v2871
        %2945 = vmatprep.subr.bf16.mxu0 0
        %2946 = vmatpush1.bf16.msra.mxu0 %v2872
        %2947 = vmatprep.subr.bf16.mxu0 0
        %2948 = vmatpush1.bf16.msra.mxu0 %v2873
        %2949 = vmatprep.subr.bf16.mxu0 0
        %2950 = vmatpush1.bf16.msra.mxu0 %v2874
        %2951 = vmatprep.subr.bf16.mxu0 0
        %2952 = vmatpush1.bf16.msra.mxu0 %v2875
        %2953 = vmatprep.subr.bf16.mxu0 0
        %2954 = vmatpush1.bf16.msra.mxu0 %v2876
        %2955 = vmatprep.subr.bf16.mxu0 0
        %2956 = vmatpush1.bf16.msra.mxu0 %v2877
        %2957 = vmatprep.subr.bf16.mxu0 0
        %2958 = vmatpush1.bf16.msra.mxu0 %v2878
        %2959 = vmatprep.mubr.bf16.mxu0 %v2657
        %2960 = vmatmul.mubr.bf16.gmra.mrb[0].mxu0 %v2656
        %v2961 = vpop.f32.mrb[0].mxu0
        %v2962 = vadd.f32 %v2733, %v2961
        %v2963 = vpop.f32.mrb[0].mxu0
        %v2964 = vpop.f32.mrb[0].mxu0
        %v2965 = vadd.f32 %v2733, %v2964
        %v2966 = vpop.f32.mrb[0].mxu0
        %2967 = vmatprep.mubr.bf16.mxu0 %v2661
        %2968 = vmatmul.mubr.bf16.gmra.mrb[0].mxu0 %v2660
        %v2969 = vpop.f32.mrb[0].mxu0
        %v2970 = vadd.f32 %v2733, %v2969
        %v2971 = vpop.f32.mrb[0].mxu0
        %v2972 = vpop.f32.mrb[0].mxu0
        %v2973 = vpop.f32.mrb[0].mxu0
        %2974 = vdwg.mxu0
        %2975 = vmatprep.subr.bf16.mxu0 0
        %2976 = vmatpush1.bf16.msra.mxu0 %v2879
        %2977 = vmatprep.subr.bf16.mxu0 0
        %2978 = vmatpush1.bf16.msra.mxu0 %v2880
        %2979 = vmatprep.subr.bf16.mxu0 0
        %2980 = vmatpush1.bf16.msra.mxu0 %v2881
        %2981 = vmatprep.subr.bf16.mxu0 0
        %2982 = vmatpush1.bf16.msra.mxu0 %v2882
        %2983 = vmatprep.subr.bf16.mxu0 0
        %2984 = vmatpush1.bf16.msra.mxu0 %v2883
        %2985 = vmatprep.subr.bf16.mxu0 0
        %2986 = vmatpush1.bf16.msra.mxu0 %v2884
        %2987 = vmatprep.subr.bf16.mxu0 0
        %2988 = vmatpush1.bf16.msra.mxu0 %v2885
        %2989 = vmatprep.subr.bf16.mxu0 0
        %2990 = vmatpush1.bf16.msra.mxu0 %v2886
        %2991 = vmatprep.subr.bf16.mxu0 0
        %2992 = vmatpush1.bf16.msra.mxu0 %v2887
        %2993 = vmatprep.subr.bf16.mxu0 0
        %2994 = vmatpush1.bf16.msra.mxu0 %v2888
        %2995 = vmatprep.subr.bf16.mxu0 0
        %2996 = vmatpush1.bf16.msra.mxu0 %v2889
        %2997 = vmatprep.subr.bf16.mxu0 0
        %2998 = vmatpush1.bf16.msra.mxu0 %v2890
        %2999 = vmatprep.subr.bf16.mxu0 0
        %3000 = vmatpush1.bf16.msra.mxu0 %v2891
        %3001 = vmatprep.subr.bf16.mxu0 0
        %3002 = vmatpush1.bf16.msra.mxu0 %v2892
        %3003 = vmatprep.subr.bf16.mxu0 0
        %3004 = vmatpush1.bf16.msra.mxu0 %v2893
        %3005 = vmatprep.subr.bf16.mxu0 0
        %3006 = vmatpush1.bf16.msra.mxu0 %v2894
        %3007 = vmatprep.mubr.bf16.mxu0 %v2659
        %3008 = vmatmul.mubr.bf16.gmra.mrb[0].mxu0 %v2658
        %v3009 = vpop.f32.mrb[0].mxu0
        %v3010 = vadd.f32 %v2962, %v3009
        %v3011 = vpop.f32.mrb[0].mxu0
        %v3012 = vpop.f32.mrb[0].mxu0
        %v3013 = vadd.f32 %v2965, %v3012
        %v3014 = vpop.f32.mrb[0].mxu0
        %3015 = vmatprep.mubr.bf16.mxu0 %v2663
        %3016 = vmatmul.mubr.bf16.gmra.mrb[0].mxu0 %v2662
        %v3017 = vpop.f32.mrb[0].mxu0
        %v3018 = vadd.f32 %v2970, %v3017
        %v3019 = vpop.f32.mrb[0].mxu0
        %v3020 = vpop.f32.mrb[0].mxu0
        %v3021 = vpop.f32.mrb[0].mxu0
        %3022 = vdwg.mxu0
        %3023 = vst [vmem:[%s299] sm:$0xff] %v3010
        %3024 = vst [vmem:[%s299 + $0x8] sm:$0xff] %v3013
        %3025 = vst [vmem:[%s299 + $0x10] sm:$0xff] %v3018
        %s3026 = sand.u32 %s182, 1
        %s3027 = scalar_lea.sflag [#allocation4], %s3026
        %s3028 = sand.u32 %s182, 1
        %s3029 = smul.addr %s3028, 24
        %s3030 = scalar_lea.vmem [#allocation5], %s3029
        // Predicated region
        $region53: #{qnet_forward_padded.1} parent=47 // pred_check
          %p3031 = pneg %p192
        $region54: #{qnet_forward_padded.1} parent=47 // pred_check_branch
          %3033 = sbr.rel (%p3031) target = $region56
        $region55: #{qnet_forward_padded.1} parent=47 // pred_region
          %s3034 = smul.u32 3, %s22
          %s3035 = ssub.s32 5, %s3034
          %p3036 = scmp.lt.s32.totalorder %s3035, 3
          %s3037 = scalar_select %p3036, %s3035, 3
          %s3038 = smul.u32 128, %s3037
          %s3040 = ssub.s32 384, %s3038
          %3041 = vsyncadd %s3027, %s3040
          %p3042 = scmp.ne.s32.totalorder 0, %s3038
          %s3043 = smul.addr %s3034, 128
          %s3044 = scalar_lea.hbm %s7, %s3043
          %s3045 = smul.u32 8, %s3037
          %s3046 = sshll.u32 %s3030, 4
          %s3047 = int_to_ptr.vmem [resolvable:$true] %s3046
          %s3048 = sshll.u32 %s3045, 4
          %3052 = dma.vmem_to_hbm [thread:$0]  (%p3042), %s3047, %s3048, %s3044, %s3027, 128, 128, 8
        $region56: #{qnet_forward_padded.1} parent=47 // pred_fallthru
          _
      $region48: #{qnet_forward_padded.1} parent=5 // pred_fallthru
        _
      %p3053 = scmp.le.s32.totalorder 2, %s17
      // Predicated region
      $region57: #{qnet_forward_padded.1} parent=5 // pred_check
        %p3054 = pneg %p3053
      $region58: #{qnet_forward_padded.1} parent=5 // pred_check_branch
        %3056 = sbr.rel (%p3054) target = $region60
      $region59: #{qnet_forward_padded.1} parent=5 // pred_region
        %s3057 = ssub.s32 %s17, 2
        // Predicated region
        $region61: #{qnet_forward_padded.1} parent=59 // pred_check
          %p3058 = pneg %p198
        $region62: #{qnet_forward_padded.1} parent=59 // pred_check_branch
          %3060 = sbr.rel (%p3058) target = $region64
        $region63: #{qnet_forward_padded.1} parent=59 // pred_region
          %s3061 = sand.u32 %s183, 1
          %s3062 = scalar_lea.sflag [#allocation4], %s3061
          %s3063 = sand.u32 %s183, 1
          %s3064 = smul.addr %s3063, 24
          %s3065 = scalar_lea.vmem [#allocation5], %s3064
          %3066 = dma.done %s3062, 384
        $region64: #{qnet_forward_padded.1} parent=59 // pred_fallthru
          _
      $region60: #{qnet_forward_padded.1} parent=5 // pred_fallthru
        _
    $region6: #{qnet_forward_padded.1} parent=1 // loop_footer
      %s21 = sadd.s32 1, %s17
    $region7: #{qnet_forward_padded.1} parent=1 // loop_footer_branch
      %16 = sbr.rel target = $region3
    $region8: #{qnet_forward_padded.1} parent=1 // loop_exit
      _
    %3067 = vsyncpa [#allocation3], 1
    %s3068 = scalar_lea.sflag [#allocation3], 1
    %3069 = vsyncpa %s3068, 1
    %3070 = vsyncpa [#allocation4], 1
    %s3071 = scalar_lea.sflag [#allocation4], 1
    %3072 = vsyncpa %s3071, 1

</llo_original>
